<compile_context>
chip_gen: v7x
topology: tpu7x:2x2x1
jax: 0.10.0
libtpu: 0.0.40
codegen_flags: <defaults>
</compile_context>

<pallas_src>
import functools

import jax
import jax.numpy as jnp
from jax import lax
from jax.experimental import pallas as pl
from jax.experimental.pallas import tpu as pltpu


# ----------------------------------------------------------------------------
# with_conv=True kernel: pad(0,1,0,1) + 3x3/stride-2 conv as ONE im2col matmul
# over a space-to-depth input block.
#
#   x_ref : (Nb, Ho, Wo, 4C)      bf16  space-to-depth image block
#   w_ref : (9C, Cout)            bf16  im2col-ordered conv weight
#   b_ref : (1, Cout)             f32   bias
#   o_ref : (Nb, Ho, Wo, Cout)    f32   output block
#   xp_ref: (Nb, Ho+1, Wo+1, 4C)  bf16  VMEM scratch = zero-halo padded input
# ----------------------------------------------------------------------------
def _downsample_conv_kernel(x_ref, w_ref, b_ref, o_ref, xp_ref):
    nb, ho, wo, c4 = x_ref.shape
    c = c4 // 4
    cout = o_ref.shape[-1]

    # Reproduce F.pad(x, (0,1,0,1)) purely in VMEM: zero halo row/col, then
    # copy the interior.  No HBM pad op.
    xp_ref[...] = jnp.zeros_like(xp_ref)
    xp_ref[:, 0:ho, 0:wo, :] = x_ref[...]
    xp = xp_ref[...]                                   # (Nb, Ho+1, Wo+1, 4C)

    # The four 2x2-conv taps over space-to-depth blocks.
    p00 = xp[:, 0:ho,     0:wo,     :]                 # block (oy  , ox  )
    p01 = xp[:, 0:ho,     1:wo + 1, :]                 # block (oy  , ox+1)
    p10 = xp[:, 1:ho + 1, 0:wo,     :]                 # block (oy+1, ox  )
    p11 = xp[:, 1:ho + 1, 1:wo + 1, :]                 # block (oy+1, ox+1)

    # Exact im2col: keep only the 9 original taps.  Channel order must match
    # _make_matmul_weight below.  (Sub-channel order inside 4C is
    # (row_parity a, col_parity b, c) -> index a*2C + b*C + c.)
    cols = jnp.concatenate(
        [p00,                          # taps (0,0) (0,1) (1,0) (1,1)
         p01[..., 0 * c:1 * c],        # tap  (0,2)
         p01[..., 2 * c:3 * c],        # tap  (1,2)
         p10[..., 0 * c:2 * c],        # taps (2,0) (2,1)
         p11[..., 0 * c:1 * c]],       # tap  (2,2)
        axis=-1)                       # (Nb, Ho, Wo, 9C)
    cols = cols.reshape(nb * ho * wo, 9 * c)

    # One MXU matmul, K = 9*C, bf16 x bf16 -> f32 accumulation.
    acc = jnp.dot(cols, w_ref[...], preferred_element_type=jnp.float32)
    out = acc + b_ref[...]
    o_ref[...] = out.reshape(nb, ho, wo, cout).astype(o_ref.dtype)


# ----------------------------------------------------------------------------
# with_conv=False kernel: 2x2 average pool == mean over the 4 space-to-depth
# sub-positions (pure VPU, f32).
# ----------------------------------------------------------------------------
def _downsample_avgpool_kernel(x_ref, o_ref):
    c = o_ref.shape[-1]
    x = x_ref[...]
    o_ref[...] = 0.25 * (x[..., 0 * c:1 * c] + x[..., 1 * c:2 * c]
                         + x[..., 2 * c:3 * c] + x[..., 3 * c:4 * c])


# ----------------------------------------------------------------------------
# Wrappers
# ----------------------------------------------------------------------------
def _space_to_depth(x_nchw, dtype):
    """(N,C,H,W) -> (N,H/2,W/2,4C), channel order (row parity, col parity, C).

    Replaces (and fuses with) the mandatory NCHW->NHWC boundary transpose;
    this is the only host-side data movement.
    """
    n, c, h, w = x_nchw.shape
    assert h % 2 == 0 and w % 2 == 0, "Downsample kernel assumes even H, W"
    ho, wo = h // 2, w // 2
    xs = x_nchw.reshape(n, c, ho, 2, wo, 2)
    xs = jnp.transpose(xs, (0, 2, 4, 3, 5, 1))          # (N, Ho, Wo, 2, 2, C)
    return xs.reshape(n, ho, wo, 4 * c).astype(dtype)


def _make_matmul_weight(w_hwio):
    """(3,3,Cin,Cout) -> (9*Cin, Cout), matching the kernel's im2col columns."""
    blocks = [w_hwio[0, 0], w_hwio[0, 1], w_hwio[1, 0], w_hwio[1, 1],  # p00
              w_hwio[0, 2],                                            # p01[a=0]
              w_hwio[1, 2],                                            # p01[a=1]
              w_hwio[2, 0], w_hwio[2, 1],                              # p10[a=0]
              w_hwio[2, 2]]                                            # p11[0,0]
    return jnp.concatenate(blocks, axis=0)


def _pick_batch_block(n, bytes_per_image, target_bytes=2 * 1024 * 1024):
    """Batch several images per grid step (amortize per-step overhead)."""
    nb = max(1, min(n, target_bytes // max(bytes_per_image, 1)))
    while n % nb:
        nb -= 1
    return int(nb)


def _conv_pallas(xs, w_mm, bias, n_block):
    n, ho, wo, c4 = xs.shape
    c = c4 // 4
    cout = w_mm.shape[-1]
    return pl.pallas_call(
        _downsample_conv_kernel,
        out_shape=jax.ShapeDtypeStruct((n, ho, wo, cout), jnp.float32),
        grid=(n // n_block,),
        in_specs=[
            pl.BlockSpec((n_block, ho, wo, c4), lambda i: (i, 0, 0, 0)),
            pl.BlockSpec((9 * c, cout), lambda i: (0, 0)),
            pl.BlockSpec((1, cout), lambda i: (0, 0)),
        ],
        out_specs=pl.BlockSpec((n_block, ho, wo, cout), lambda i: (i, 0, 0, 0)),
        scratch_shapes=[pltpu.VMEM((n_block, ho + 1, wo + 1, c4), xs.dtype)],
        compiler_params=pltpu.CompilerParams(dimension_semantics=("parallel",)),
    )(xs, w_mm, bias)


def _avgpool_pallas(xs, n_block):
    n, ho, wo, c4 = xs.shape
    c = c4 // 4
    return pl.pallas_call(
        _downsample_avgpool_kernel,
        out_shape=jax.ShapeDtypeStruct((n, ho, wo, c), jnp.float32),
        grid=(n // n_block,),
        in_specs=[pl.BlockSpec((n_block, ho, wo, c4), lambda i: (i, 0, 0, 0))],
        out_specs=pl.BlockSpec((n_block, ho, wo, c), lambda i: (i, 0, 0, 0)),
        compiler_params=pltpu.CompilerParams(dimension_semantics=("parallel",)),
    )(xs)


def downsample_forward(x_nchw, *, with_conv, conv_w_hwio=None, conv_b=None):
    """Downsample.forward.  NCHW in / NCHW out (matching PyTorch).

    conv_w_hwio is the Conv2d weight in HWIO layout, i.e.
    torch_weight.permute(2, 3, 1, 0); conv_b is the (C,) bias.
    """
    n, c, h, w = x_nchw.shape
    ho, wo = h // 2, w // 2
    if with_conv:
        xs = _space_to_depth(x_nchw, jnp.bfloat16)
        w_mm = _make_matmul_weight(conv_w_hwio).astype(jnp.bfloat16)
        bias = conv_b.reshape(1, c).astype(jnp.float32)
        nb = _pick_batch_block(n, ho * wo * 4 * c * 2)
        y = _conv_pallas(xs, w_mm, bias, nb)
    else:
        xs = _space_to_depth(x_nchw, jnp.float32)
        nb = _pick_batch_block(n, ho * wo * 4 * c * 4)
        y = _avgpool_pallas(xs, nb)
    return jnp.transpose(y, (0, 3, 1, 2))                # NHWC -> NCHW


# ----------------------------------------------------------------------------
# Pure-JAX reference (sanity check).
# ----------------------------------------------------------------------------
def reference_downsample(x_nchw, *, with_conv, conv_w_hwio=None, conv_b=None):
    x = jnp.transpose(x_nchw, (0, 2, 3, 1))
    if with_conv:
        xp = jnp.pad(x, ((0, 0), (0, 1), (0, 1), (0, 0)))
        y = lax.conv_general_dilated(
            xp, conv_w_hwio, window_strides=(2, 2), padding="VALID",
            dimension_numbers=("NHWC", "HWIO", "NHWC"),
            precision=lax.Precision.HIGHEST) + conv_b
    else:
        n, h, w, c = x.shape
        y = x.reshape(n, h // 2, 2, w // 2, 2, c).mean(axis=(2, 4))
    return jnp.transpose(y, (0, 3, 1, 2))


if __name__ == "__main__":
    # C=128 keeps both the matmul output and the stores lane-dense.
    N, C, H, W = 2, 128, 16, 16
    key = jax.random.PRNGKey(0)
    kx, kw, kb = jax.random.split(key, 3)
    x = jax.random.normal(kx, (N, C, H, W), jnp.float32)
    w_hwio = 0.1 * jax.random.normal(kw, (3, 3, C, C), jnp.float32)
    b = 0.1 * jax.random.normal(kb, (C,), jnp.float32)

    fwd_conv = jax.jit(functools.partial(downsample_forward, with_conv=True))
    fwd_pool = jax.jit(functools.partial(downsample_forward, with_conv=False))

    out_conv = jax.block_until_ready(fwd_conv(x, conv_w_hwio=w_hwio, conv_b=b))
    assert out_conv.shape == (N, C, H // 2, W // 2), out_conv.shape

    out_pool = jax.block_until_ready(fwd_pool(x))
    assert out_pool.shape == (N, C, H // 2, W // 2), out_pool.shape

    # The conv kernel multiplies in bf16 (f32 accumulation), so compare against
    # an f32 reference fed identically bf16-quantized inputs/weights.
    xq = x.astype(jnp.bfloat16).astype(jnp.float32)
    wq = w_hwio.astype(jnp.bfloat16).astype(jnp.float32)
    ref_conv = reference_downsample(xq, with_conv=True, conv_w_hwio=wq, conv_b=b)
    err_conv = float(jnp.max(jnp.abs(out_conv - ref_conv)))
    assert err_conv < 1e-2, f"conv mismatch, max abs err = {err_conv}"

    ref_pool = reference_downsample(x, with_conv=False)
    err_pool = float(jnp.max(jnp.abs(out_pool - ref_pool)))
    assert err_pool < 1e-5, f"avg_pool mismatch, max abs err = {err_pool}"

    print("KERNEL_OK")
</pallas_src>

<mosaic_0001>
module attributes {stable_mosaic.version = 11 : i64} {
  func.func @_downsample_conv_kernel(%arg0: i32, %arg1: memref<2x8x8x512xbf16, #tpu.memory_space<vmem>>, %arg2: memref<1152x128xbf16, #tpu.memory_space<vmem>>, %arg3: memref<1x128xf32, #tpu.memory_space<vmem>>, %arg4: memref<2x8x8x128xf32, #tpu.memory_space<vmem>>, %arg5: memref<2x9x9x512xbf16, #tpu.memory_space<vmem>>) attributes {dimension_semantics = [#tpu.dimension_semantics<parallel>], iteration_bounds = array<i64: 1>, scalar_prefetch = 0 : i64, scratch_operands = 1 : i64, tpu.core_type = #tpu.core_type<tc>, window_params = [{transform_indices = @transform_0, window_bounds = array<i64: 2, 8, 8, 512>}, {pipeline_mode = #tpu.pipeline_mode<synchronous>, transform_indices = @transform_1, window_bounds = array<i64: 1152, 128>}, {pipeline_mode = #tpu.pipeline_mode<synchronous>, transform_indices = @transform_2, window_bounds = array<i64: 1, 128>}, {transform_indices = @transform_3, window_bounds = array<i64: 2, 8, 8, 128>}]} {
    %cst = arith.constant 0.000000e+00 : bf16
    %0 = vector.broadcast %cst : bf16 to vector<2x9x9x512xbf16>
    %c0 = arith.constant 0 : index
    %c0_0 = arith.constant 0 : index
    %c0_1 = arith.constant 0 : index
    %c0_2 = arith.constant 0 : index
    %1 = vector.load %arg5[%c0, %c0_0, %c0_1, %c0_2] : memref<2x9x9x512xbf16, #tpu.memory_space<vmem>>, vector<2x9x9x512xbf16>
    tpu.vector_store %arg5[%c0, %c0_0, %c0_1, %c0_2], %0 {strides = array<i32>} : memref<2x9x9x512xbf16, #tpu.memory_space<vmem>>, vector<2x9x9x512xbf16>,
    %c0_3 = arith.constant 0 : index
    %c0_4 = arith.constant 0 : index
    %c0_5 = arith.constant 0 : index
    %c0_6 = arith.constant 0 : index
    %2 = vector.load %arg1[%c0_3, %c0_4, %c0_5, %c0_6] : memref<2x8x8x512xbf16, #tpu.memory_space<vmem>>, vector<2x8x8x512xbf16>
    %c0_7 = arith.constant 0 : index
    %c0_8 = arith.constant 0 : index
    %c0_9 = arith.constant 0 : index
    %c0_10 = arith.constant 0 : index
    %3 = vector.load %arg5[%c0_7, %c0_8, %c0_9, %c0_10] : memref<2x9x9x512xbf16, #tpu.memory_space<vmem>>, vector<2x8x8x512xbf16>
    tpu.vector_store %arg5[%c0_7, %c0_8, %c0_9, %c0_10], %2 {strides = array<i32>} : memref<2x9x9x512xbf16, #tpu.memory_space<vmem>>, vector<2x8x8x512xbf16>,
    %c0_11 = arith.constant 0 : index
    %c0_12 = arith.constant 0 : index
    %c0_13 = arith.constant 0 : index
    %c0_14 = arith.constant 0 : index
    %4 = vector.load %arg5[%c0_11, %c0_12, %c0_13, %c0_14] : memref<2x9x9x512xbf16, #tpu.memory_space<vmem>>, vector<2x9x9x512xbf16>
    %5 = vector.extract_strided_slice %4 {offsets = [0, 0, 0, 0], sizes = [2, 8, 8, 512], strides = [1, 1, 1, 1]} : vector<2x9x9x512xbf16> to vector<2x8x8x512xbf16>
    %6 = vector.extract_strided_slice %4 {offsets = [0, 0, 1, 0], sizes = [2, 8, 8, 512], strides = [1, 1, 1, 1]} : vector<2x9x9x512xbf16> to vector<2x8x8x512xbf16>
    %7 = vector.extract_strided_slice %4 {offsets = [0, 1, 0, 0], sizes = [2, 8, 8, 512], strides = [1, 1, 1, 1]} : vector<2x9x9x512xbf16> to vector<2x8x8x512xbf16>
    %8 = vector.extract_strided_slice %4 {offsets = [0, 1, 1, 0], sizes = [2, 8, 8, 512], strides = [1, 1, 1, 1]} : vector<2x9x9x512xbf16> to vector<2x8x8x512xbf16>
    %9 = vector.extract_strided_slice %6 {offsets = [0, 0, 0, 0], sizes = [2, 8, 8, 128], strides = [1, 1, 1, 1]} : vector<2x8x8x512xbf16> to vector<2x8x8x128xbf16>
    %10 = vector.extract_strided_slice %6 {offsets = [0, 0, 0, 256], sizes = [2, 8, 8, 128], strides = [1, 1, 1, 1]} : vector<2x8x8x512xbf16> to vector<2x8x8x128xbf16>
    %11 = vector.extract_strided_slice %7 {offsets = [0, 0, 0, 0], sizes = [2, 8, 8, 256], strides = [1, 1, 1, 1]} : vector<2x8x8x512xbf16> to vector<2x8x8x256xbf16>
    %12 = vector.extract_strided_slice %8 {offsets = [0, 0, 0, 0], sizes = [2, 8, 8, 128], strides = [1, 1, 1, 1]} : vector<2x8x8x512xbf16> to vector<2x8x8x128xbf16>
    %13 = tpu.concatenate %5, %9, %10, %11, %12 in 3 : vector<2x8x8x512xbf16>, vector<2x8x8x128xbf16>, vector<2x8x8x128xbf16>, vector<2x8x8x256xbf16>, vector<2x8x8x128xbf16> -> vector<2x8x8x1152xbf16>
    %14 = vector.shape_cast %13 : vector<2x8x8x1152xbf16> to vector<128x1152xbf16>
    %c0_15 = arith.constant 0 : index
    %c0_16 = arith.constant 0 : index
    %15 = vector.load %arg2[%c0_15, %c0_16] : memref<1152x128xbf16, #tpu.memory_space<vmem>>, vector<1152x128xbf16>
    %cst_17 = arith.constant dense<0.000000e+00> : vector<128x128xf32>
    %16 = tpu.matmul %14, %15, %cst_17 {dimension_numbers = #tpu.dot_dimension_numbers<[1], [0], [0], [1], [0, 0, 1, 1], [], []>} : vector<128x1152xbf16>, vector<1152x128xbf16>, vector<128x128xf32> -> vector<128x128xf32>
    %c0_18 = arith.constant 0 : index
    %c0_19 = arith.constant 0 : index
    %17 = vector.load %arg3[%c0_18, %c0_19] : memref<1x128xf32, #tpu.memory_space<vmem>>, vector<1x128xf32>
    %18 = vector.broadcast %17 : vector<1x128xf32> to vector<128x128xf32>
    %19 = arith.addf %16, %18 : vector<128x128xf32>
    %20 = vector.shape_cast %19 : vector<128x128xf32> to vector<2x8x8x128xf32>
    %c0_20 = arith.constant 0 : index
    %c0_21 = arith.constant 0 : index
    %c0_22 = arith.constant 0 : index
    %c0_23 = arith.constant 0 : index
    %21 = vector.load %arg4[%c0_20, %c0_21, %c0_22, %c0_23] : memref<2x8x8x128xf32, #tpu.memory_space<vmem>>, vector<2x8x8x128xf32>
    tpu.vector_store %arg4[%c0_20, %c0_21, %c0_22, %c0_23], %20 {strides = array<i32>} : memref<2x8x8x128xf32, #tpu.memory_space<vmem>>, vector<2x8x8x128xf32>,
    return
  }
  func.func @transform_0(%arg0: i32) -> (i32, i32, i32, i32) {
    %c0_i32 = arith.constant 0 : i32
    %c0_i32_0 = arith.constant 0 : i32
    %c0_i32_1 = arith.constant 0 : i32
    %c0_i32_2 = arith.constant 0 : i32
    return %arg0, %c0_i32, %c0_i32_0, %c0_i32_1 : i32, i32, i32, i32
  }
  func.func @transform_1(%arg0: i32) -> (i32, i32) {
    %c0_i32 = arith.constant 0 : i32
    %c0_i32_0 = arith.constant 0 : i32
    %c0_i32_1 = arith.constant 0 : i32
    return %c0_i32, %c0_i32_0 : i32, i32
  }
  func.func @transform_2(%arg0: i32) -> (i32, i32) {
    %c0_i32 = arith.constant 0 : i32
    %c0_i32_0 = arith.constant 0 : i32
    %c0_i32_1 = arith.constant 0 : i32
    return %c0_i32, %c0_i32_0 : i32, i32
  }
  func.func @transform_3(%arg0: i32) -> (i32, i32, i32, i32) {
    %c0_i32 = arith.constant 0 : i32
    %c0_i32_0 = arith.constant 0 : i32
    %c0_i32_1 = arith.constant 0 : i32
    %c0_i32_2 = arith.constant 0 : i32
    return %arg0, %c0_i32, %c0_i32_0, %c0_i32_1 : i32, i32, i32, i32
  }
}

</mosaic_0001>

<llo_original>
// kernel: downsample_forward.1
$region0: #{downsample_forward.1}
  #allocation0 [shape = 'u32[]', space=smem, size = 0x4, offset = 0x4, fixed_abs, tag = 'smem constant byte address 0x4 - core index']
  #allocation1 [shape = 'u32[144,128]{1,0:T(1,128)}', space=vmem, size = 0x12000, scoped, tag = 'internal scratch']
  #allocation2 [shape = 'bf16[2,9,9,512]{3,2,1,0:T(8,128)(2,1)}', space=vmem, size = 0x48000, scoped, tag = 'scratch operand']
  %s0 = inlined_call_operand.vmem [shape: bf16[2,8,8,512], index: 0, kind: input, shape index: {}]
  %s1 = inlined_call_operand.vmem [shape: bf16[1152,128], index: 1, kind: input, shape index: {}]
  %s2 = inlined_call_operand.vmem [shape: f32[1,128], index: 2, kind: input, shape index: {}]
  %s3 = inlined_call_operand.hbm [shape: f32[2,8,8,128], index: 3, kind: output, shape index: {}]
  %s4 = sld [smem:[#allocation0]]
  $region22: #{downsample_forward.1} parent=0
    _
  %s6 = ssub.s32 1, %s4
  %s7 = scalar_select 0, %s6, %s4
  $region1: #{downsample_forward.1} parent=0
    #allocation3 [shape = 'u8[65536]{0}', space=vmem, size = 0x10000, scoped, tag = 'output window, operand 0, single buffered']
    #allocation4 [shape = 's32[1]{0}', space=sflag, size = 0x4, scoped, tag = 'scoped memory for downsample_forward.1']
    %8 = vsyncpa [#allocation4], 0
    // Predicated region
    $region2: #{downsample_forward.1} parent=1 // pred_check
      _
    $region3: #{downsample_forward.1} parent=1 // pred_check_branch
      %10 = sbr.rel (0) target = $region5
    $region4: #{downsample_forward.1} parent=1 // pred_region
      _
    $region5: #{downsample_forward.1} parent=1 // pred_fallthru
      _
    // Predicated region
    $region6: #{downsample_forward.1} parent=1 // pred_check
      _
    $region7: #{downsample_forward.1} parent=1 // pred_check_branch
      %12 = sbr.rel (0) target = $region9
    $region8: #{downsample_forward.1} parent=1 // pred_region
      _
    $region9: #{downsample_forward.1} parent=1 // pred_fallthru
      _
    // Predicated region
    $region10: #{downsample_forward.1} parent=1 // pred_check
      _
    $region11: #{downsample_forward.1} parent=1 // pred_check_branch
      %14 = sbr.rel (0) target = $region13
    $region12: #{downsample_forward.1} parent=1 // pred_region
      _
    $region13: #{downsample_forward.1} parent=1 // pred_fallthru
      _
    %16 = vst [vmem:[#allocation2] sm:$0xff] 0
    %17 = vst [vmem:[#allocation2 + $0x8] sm:$0xff] 0
    %vm18 = vcmask 1040384
    %vm19 = vsmask.f32 256
    %vm20 = vmand %vm18, %vm19
    %vm21 = vcmask 1044484
    %vm22 = vsmask.f32 4352
    %vm23 = vmand %vm21, %vm22
    %vm24 = vmor %vm23, %vm20
    %v25 = vld [vmem:[#allocation2 + $0x10] sm:$0x11]
    %v26 = vsel %vm24, 0, %v25
    %27 = vst [vmem:[#allocation2 + $0x10] sm:$0x11] %v26
    %v28 = vld [vmem:[#allocation2 + $0x18] sm:$0x11]
    %v29 = vsel %vm24, 0, %v28
    %30 = vst [vmem:[#allocation2 + $0x18] sm:$0x11] %v29
    %31 = vst [vmem:[#allocation2 + $0x20] sm:$0xff] 0
    %32 = vst [vmem:[#allocation2 + $0x28] sm:$0xff] 0
    %v33 = vld [vmem:[#allocation2 + $0x30] sm:$0x11]
    %v34 = vsel %vm24, 0, %v33
    %35 = vst [vmem:[#allocation2 + $0x30] sm:$0x11] %v34
    %v36 = vld [vmem:[#allocation2 + $0x38] sm:$0x11]
    %v37 = vsel %vm24, 0, %v36
    %38 = vst [vmem:[#allocation2 + $0x38] sm:$0x11] %v37
    %39 = vst [vmem:[#allocation2 + $0x40] sm:$0xff] 0
    %40 = vst [vmem:[#allocation2 + $0x48] sm:$0xff] 0
    %v41 = vld [vmem:[#allocation2 + $0x50] sm:$0x11]
    %v42 = vsel %vm24, 0, %v41
    %43 = vst [vmem:[#allocation2 + $0x50] sm:$0x11] %v42
    %v44 = vld [vmem:[#allocation2 + $0x58] sm:$0x11]
    %v45 = vsel %vm24, 0, %v44
    %46 = vst [vmem:[#allocation2 + $0x58] sm:$0x11] %v45
    %47 = vst [vmem:[#allocation2 + $0x60] sm:$0xff] 0
    %48 = vst [vmem:[#allocation2 + $0x68] sm:$0xff] 0
    %v49 = vld [vmem:[#allocation2 + $0x70] sm:$0x11]
    %v50 = vsel %vm24, 0, %v49
    %51 = vst [vmem:[#allocation2 + $0x70] sm:$0x11] %v50
    %v52 = vld [vmem:[#allocation2 + $0x78] sm:$0x11]
    %v53 = vsel %vm24, 0, %v52
    %54 = vst [vmem:[#allocation2 + $0x78] sm:$0x11] %v53
    %55 = vst [vmem:[#allocation2 + $0x80] sm:$0xff] 0
    %56 = vst [vmem:[#allocation2 + $0x88] sm:$0xff] 0
    %v57 = vld [vmem:[#allocation2 + $0x90] sm:$0x11]
    %v58 = vsel %vm24, 0, %v57
    %59 = vst [vmem:[#allocation2 + $0x90] sm:$0x11] %v58
    %v60 = vld [vmem:[#allocation2 + $0x98] sm:$0x11]
    %v61 = vsel %vm24, 0, %v60
    %62 = vst [vmem:[#allocation2 + $0x98] sm:$0x11] %v61
    %63 = vst [vmem:[#allocation2 + $0xa0] sm:$0xff] 0
    %64 = vst [vmem:[#allocation2 + $0xa8] sm:$0xff] 0
    %v65 = vld [vmem:[#allocation2 + $0xb0] sm:$0x11]
    %v66 = vsel %vm24, 0, %v65
    %67 = vst [vmem:[#allocation2 + $0xb0] sm:$0x11] %v66
    %v68 = vld [vmem:[#allocation2 + $0xb8] sm:$0x11]
    %v69 = vsel %vm24, 0, %v68
    %70 = vst [vmem:[#allocation2 + $0xb8] sm:$0x11] %v69
    %71 = vst [vmem:[#allocation2 + $0xc0] sm:$0xff] 0
    %72 = vst [vmem:[#allocation2 + $0xc8] sm:$0xff] 0
    %v73 = vld [vmem:[#allocation2 + $0xd0] sm:$0x11]
    %v74 = vsel %vm24, 0, %v73
    %75 = vst [vmem:[#allocation2 + $0xd0] sm:$0x11] %v74
    %v76 = vld [vmem:[#allocation2 + $0xd8] sm:$0x11]
    %v77 = vsel %vm24, 0, %v76
    %78 = vst [vmem:[#allocation2 + $0xd8] sm:$0x11] %v77
    %79 = vst [vmem:[#allocation2 + $0xe0] sm:$0xff] 0
    %80 = vst [vmem:[#allocation2 + $0xe8] sm:$0xff] 0
    %v81 = vld [vmem:[#allocation2 + $0xf0] sm:$0x11]
    %v82 = vsel %vm24, 0, %v81
    %83 = vst [vmem:[#allocation2 + $0xf0] sm:$0x11] %v82
    %v84 = vld [vmem:[#allocation2 + $0xf8] sm:$0x11]
    %v85 = vsel %vm24, 0, %v84
    %86 = vst [vmem:[#allocation2 + $0xf8] sm:$0x11] %v85
    %87 = vst [vmem:[#allocation2 + $0x100] sm:$0xff] 0
    %88 = vst [vmem:[#allocation2 + $0x108] sm:$0xff] 0
    %v89 = vld [vmem:[#allocation2 + $0x110] sm:$0x11]
    %v90 = vsel %vm24, 0, %v89
    %91 = vst [vmem:[#allocation2 + $0x110] sm:$0x11] %v90
    %v92 = vld [vmem:[#allocation2 + $0x118] sm:$0x11]
    %v93 = vsel %vm24, 0, %v92
    %94 = vst [vmem:[#allocation2 + $0x118] sm:$0x11] %v93
    %95 = vst [vmem:[#allocation2 + $0x120] sm:$0xff] 0
    %96 = vst [vmem:[#allocation2 + $0x128] sm:$0xff] 0
    %v97 = vld [vmem:[#allocation2 + $0x130] sm:$0x11]
    %v98 = vsel %vm24, 0, %v97
    %99 = vst [vmem:[#allocation2 + $0x130] sm:$0x11] %v98
    %v100 = vld [vmem:[#allocation2 + $0x138] sm:$0x11]
    %v101 = vsel %vm24, 0, %v100
    %102 = vst [vmem:[#allocation2 + $0x138] sm:$0x11] %v101
    %103 = vst [vmem:[#allocation2 + $0x140] sm:$0xff] 0
    %104 = vst [vmem:[#allocation2 + $0x148] sm:$0xff] 0
    %v105 = vld [vmem:[#allocation2 + $0x150] sm:$0x11]
    %v106 = vsel %vm24, 0, %v105
    %107 = vst [vmem:[#allocation2 + $0x150] sm:$0x11] %v106
    %v108 = vld [vmem:[#allocation2 + $0x158] sm:$0x11]
    %v109 = vsel %vm24, 0, %v108
    %110 = vst [vmem:[#allocation2 + $0x158] sm:$0x11] %v109
    %111 = vst [vmem:[#allocation2 + $0x160] sm:$0xff] 0
    %112 = vst [vmem:[#allocation2 + $0x168] sm:$0xff] 0
    %v113 = vld [vmem:[#allocation2 + $0x170] sm:$0x11]
    %v114 = vsel %vm24, 0, %v113
    %115 = vst [vmem:[#allocation2 + $0x170] sm:$0x11] %v114
    %v116 = vld [vmem:[#allocation2 + $0x178] sm:$0x11]
    %v117 = vsel %vm24, 0, %v116
    %118 = vst [vmem:[#allocation2 + $0x178] sm:$0x11] %v117
    %119 = vst [vmem:[#allocation2 + $0x180] sm:$0xff] 0
    %120 = vst [vmem:[#allocation2 + $0x188] sm:$0xff] 0
    %v121 = vld [vmem:[#allocation2 + $0x190] sm:$0x11]
    %v122 = vsel %vm24, 0, %v121
    %123 = vst [vmem:[#allocation2 + $0x190] sm:$0x11] %v122
    %v124 = vld [vmem:[#allocation2 + $0x198] sm:$0x11]
    %v125 = vsel %vm24, 0, %v124
    %126 = vst [vmem:[#allocation2 + $0x198] sm:$0x11] %v125
    %127 = vst [vmem:[#allocation2 + $0x1a0] sm:$0xff] 0
    %128 = vst [vmem:[#allocation2 + $0x1a8] sm:$0xff] 0
    %v129 = vld [vmem:[#allocation2 + $0x1b0] sm:$0x11]
    %v130 = vsel %vm24, 0, %v129
    %131 = vst [vmem:[#allocation2 + $0x1b0] sm:$0x11] %v130
    %v132 = vld [vmem:[#allocation2 + $0x1b8] sm:$0x11]
    %v133 = vsel %vm24, 0, %v132
    %134 = vst [vmem:[#allocation2 + $0x1b8] sm:$0x11] %v133
    %135 = vst [vmem:[#allocation2 + $0x1c0] sm:$0xff] 0
    %136 = vst [vmem:[#allocation2 + $0x1c8] sm:$0xff] 0
    %v137 = vld [vmem:[#allocation2 + $0x1d0] sm:$0x11]
    %v138 = vsel %vm24, 0, %v137
    %139 = vst [vmem:[#allocation2 + $0x1d0] sm:$0x11] %v138
    %v140 = vld [vmem:[#allocation2 + $0x1d8] sm:$0x11]
    %v141 = vsel %vm24, 0, %v140
    %142 = vst [vmem:[#allocation2 + $0x1d8] sm:$0x11] %v141
    %143 = vst [vmem:[#allocation2 + $0x1e0] sm:$0xff] 0
    %144 = vst [vmem:[#allocation2 + $0x1e8] sm:$0xff] 0
    %v145 = vld [vmem:[#allocation2 + $0x1f0] sm:$0x11]
    %v146 = vsel %vm24, 0, %v145
    %147 = vst [vmem:[#allocation2 + $0x1f0] sm:$0x11] %v146
    %v148 = vld [vmem:[#allocation2 + $0x1f8] sm:$0x11]
    %v149 = vsel %vm24, 0, %v148
    %150 = vst [vmem:[#allocation2 + $0x1f8] sm:$0x11] %v149
    %151 = vst [vmem:[#allocation2 + $0x200] sm:$0xff] 0
    %152 = vst [vmem:[#allocation2 + $0x208] sm:$0xff] 0
    %v153 = vld [vmem:[#allocation2 + $0x210] sm:$0x11]
    %v154 = vsel %vm24, 0, %v153
    %155 = vst [vmem:[#allocation2 + $0x210] sm:$0x11] %v154
    %v156 = vld [vmem:[#allocation2 + $0x218] sm:$0x11]
    %v157 = vsel %vm24, 0, %v156
    %158 = vst [vmem:[#allocation2 + $0x218] sm:$0x11] %v157
    %159 = vst [vmem:[#allocation2 + $0x220] sm:$0xff] 0
    %160 = vst [vmem:[#allocation2 + $0x228] sm:$0xff] 0
    %v161 = vld [vmem:[#allocation2 + $0x230] sm:$0x11]
    %v162 = vsel %vm24, 0, %v161
    %163 = vst [vmem:[#allocation2 + $0x230] sm:$0x11] %v162
    %v164 = vld [vmem:[#allocation2 + $0x238] sm:$0x11]
    %v165 = vsel %vm24, 0, %v164
    %166 = vst [vmem:[#allocation2 + $0x238] sm:$0x11] %v165
    %v167 = vld [vmem:[%s0] sm:$0xff]
    %v168 = vld [vmem:[%s0 + $0x8] sm:$0xff]
    %v169 = vld [vmem:[%s0 + $0x10] sm:$0xff]
    %v170 = vld [vmem:[%s0 + $0x18] sm:$0xff]
    %v171 = vld [vmem:[%s0 + $0x20] sm:$0xff]
    %v172 = vld [vmem:[%s0 + $0x28] sm:$0xff]
    %v173 = vld [vmem:[%s0 + $0x30] sm:$0xff]
    %v174 = vld [vmem:[%s0 + $0x38] sm:$0xff]
    %v175 = vld [vmem:[%s0 + $0x40] sm:$0xff]
    %v176 = vld [vmem:[%s0 + $0x48] sm:$0xff]
    %v177 = vld [vmem:[%s0 + $0x50] sm:$0xff]
    %v178 = vld [vmem:[%s0 + $0x58] sm:$0xff]
    %v179 = vld [vmem:[%s0 + $0x60] sm:$0xff]
    %v180 = vld [vmem:[%s0 + $0x68] sm:$0xff]
    %v181 = vld [vmem:[%s0 + $0x70] sm:$0xff]
    %v182 = vld [vmem:[%s0 + $0x78] sm:$0xff]
    %v183 = vld [vmem:[%s0 + $0x80] sm:$0xff]
    %v184 = vld [vmem:[%s0 + $0x88] sm:$0xff]
    %v185 = vld [vmem:[%s0 + $0x90] sm:$0xff]
    %v186 = vld [vmem:[%s0 + $0x98] sm:$0xff]
    %v187 = vld [vmem:[%s0 + $0xa0] sm:$0xff]
    %v188 = vld [vmem:[%s0 + $0xa8] sm:$0xff]
    %v189 = vld [vmem:[%s0 + $0xb0] sm:$0xff]
    %v190 = vld [vmem:[%s0 + $0xb8] sm:$0xff]
    %v191 = vld [vmem:[%s0 + $0xc0] sm:$0xff]
    %v192 = vld [vmem:[%s0 + $0xc8] sm:$0xff]
    %v193 = vld [vmem:[%s0 + $0xd0] sm:$0xff]
    %v194 = vld [vmem:[%s0 + $0xd8] sm:$0xff]
    %v195 = vld [vmem:[%s0 + $0xe0] sm:$0xff]
    %v196 = vld [vmem:[%s0 + $0xe8] sm:$0xff]
    %v197 = vld [vmem:[%s0 + $0xf0] sm:$0xff]
    %v198 = vld [vmem:[%s0 + $0xf8] sm:$0xff]
    %199 = vst [vmem:[#allocation2] sm:$0xff] %v167
    %200 = vst [vmem:[#allocation2 + $0x8] sm:$0xff] %v168
    %201 = vst [vmem:[#allocation2 + $0x20] sm:$0xff] %v169
    %202 = vst [vmem:[#allocation2 + $0x28] sm:$0xff] %v170
    %203 = vst [vmem:[#allocation2 + $0x40] sm:$0xff] %v171
    %204 = vst [vmem:[#allocation2 + $0x48] sm:$0xff] %v172
    %205 = vst [vmem:[#allocation2 + $0x60] sm:$0xff] %v173
    %206 = vst [vmem:[#allocation2 + $0x68] sm:$0xff] %v174
    %207 = vst [vmem:[#allocation2 + $0x80] sm:$0xff] %v175
    %208 = vst [vmem:[#allocation2 + $0x88] sm:$0xff] %v176
    %209 = vst [vmem:[#allocation2 + $0xa0] sm:$0xff] %v177
    %210 = vst [vmem:[#allocation2 + $0xa8] sm:$0xff] %v178
    %211 = vst [vmem:[#allocation2 + $0xc0] sm:$0xff] %v179
    %212 = vst [vmem:[#allocation2 + $0xc8] sm:$0xff] %v180
    %213 = vst [vmem:[#allocation2 + $0xe0] sm:$0xff] %v181
    %214 = vst [vmem:[#allocation2 + $0xe8] sm:$0xff] %v182
    %215 = vst [vmem:[#allocation2 + $0x120] sm:$0xff] %v183
    %216 = vst [vmem:[#allocation2 + $0x128] sm:$0xff] %v184
    %217 = vst [vmem:[#allocation2 + $0x140] sm:$0xff] %v185
    %218 = vst [vmem:[#allocation2 + $0x148] sm:$0xff] %v186
    %219 = vst [vmem:[#allocation2 + $0x160] sm:$0xff] %v187
    %220 = vst [vmem:[#allocation2 + $0x168] sm:$0xff] %v188
    %221 = vst [vmem:[#allocation2 + $0x180] sm:$0xff] %v189
    %222 = vst [vmem:[#allocation2 + $0x188] sm:$0xff] %v190
    %223 = vst [vmem:[#allocation2 + $0x1a0] sm:$0xff] %v191
    %224 = vst [vmem:[#allocation2 + $0x1a8] sm:$0xff] %v192
    %225 = vst [vmem:[#allocation2 + $0x1c0] sm:$0xff] %v193
    %226 = vst [vmem:[#allocation2 + $0x1c8] sm:$0xff] %v194
    %227 = vst [vmem:[#allocation2 + $0x1e0] sm:$0xff] %v195
    %228 = vst [vmem:[#allocation2 + $0x1e8] sm:$0xff] %v196
    %229 = vst [vmem:[#allocation2 + $0x200] sm:$0xff] %v197
    %230 = vst [vmem:[#allocation2 + $0x208] sm:$0xff] %v198
    %v231 = vld [vmem:[#allocation2] sm:$0xff]
    %v232 = vld [vmem:[#allocation2 + $0x8] sm:$0xff]
    %v233 = vld [vmem:[#allocation2 + $0x10] sm:$0x11]
    %v234 = vld [vmem:[#allocation2 + $0x18] sm:$0x11]
    %v235 = vld [vmem:[#allocation2 + $0x20] sm:$0xff]
    %v236 = vld [vmem:[#allocation2 + $0x28] sm:$0xff]
    %v237 = vld [vmem:[#allocation2 + $0x30] sm:$0x11]
    %v238 = vld [vmem:[#allocation2 + $0x38] sm:$0x11]
    %v239 = vld [vmem:[#allocation2 + $0x40] sm:$0xff]
    %v240 = vld [vmem:[#allocation2 + $0x48] sm:$0xff]
    %v241 = vld [vmem:[#allocation2 + $0x50] sm:$0x11]
    %v242 = vld [vmem:[#allocation2 + $0x58] sm:$0x11]
    %v243 = vld [vmem:[#allocation2 + $0x60] sm:$0xff]
    %v244 = vld [vmem:[#allocation2 + $0x68] sm:$0xff]
    %v245 = vld [vmem:[#allocation2 + $0x70] sm:$0x11]
    %v246 = vld [vmem:[#allocation2 + $0x78] sm:$0x11]
    %v247 = vld [vmem:[#allocation2 + $0x80] sm:$0xff]
    %v248 = vld [vmem:[#allocation2 + $0x88] sm:$0xff]
    %v249 = vld [vmem:[#allocation2 + $0x90] sm:$0x11]
    %v250 = vld [vmem:[#allocation2 + $0x98] sm:$0x11]
    %v251 = vld [vmem:[#allocation2 + $0xa0] sm:$0xff]
    %v252 = vld [vmem:[#allocation2 + $0xa8] sm:$0xff]
    %v253 = vld [vmem:[#allocation2 + $0xb0] sm:$0x11]
    %v254 = vld [vmem:[#allocation2 + $0xb8] sm:$0x11]
    %v255 = vld [vmem:[#allocation2 + $0xc0] sm:$0xff]
    %v256 = vld [vmem:[#allocation2 + $0xc8] sm:$0xff]
    %v257 = vld [vmem:[#allocation2 + $0xd0] sm:$0x11]
    %v258 = vld [vmem:[#allocation2 + $0xd8] sm:$0x11]
    %v259 = vld [vmem:[#allocation2 + $0xe0] sm:$0xff]
    %v260 = vld [vmem:[#allocation2 + $0xe8] sm:$0xff]
    %v261 = vld [vmem:[#allocation2 + $0xf0] sm:$0x11]
    %v262 = vld [vmem:[#allocation2 + $0xf8] sm:$0x11]
    %v263 = vld [vmem:[#allocation2 + $0x100] sm:$0xff]
    %v264 = vld [vmem:[#allocation2 + $0x110] sm:$0x11]
    %v265 = vld [vmem:[#allocation2 + $0x120] sm:$0xff]
    %v266 = vld [vmem:[#allocation2 + $0x128] sm:$0xff]
    %v267 = vld [vmem:[#allocation2 + $0x130] sm:$0x11]
    %v268 = vld [vmem:[#allocation2 + $0x138] sm:$0x11]
    %v269 = vld [vmem:[#allocation2 + $0x140] sm:$0xff]
    %v270 = vld [vmem:[#allocation2 + $0x148] sm:$0xff]
    %v271 = vld [vmem:[#allocation2 + $0x150] sm:$0x11]
    %v272 = vld [vmem:[#allocation2 + $0x158] sm:$0x11]
    %v273 = vld [vmem:[#allocation2 + $0x160] sm:$0xff]
    %v274 = vld [vmem:[#allocation2 + $0x168] sm:$0xff]
    %v275 = vld [vmem:[#allocation2 + $0x170] sm:$0x11]
    %v276 = vld [vmem:[#allocation2 + $0x178] sm:$0x11]
    %v277 = vld [vmem:[#allocation2 + $0x180] sm:$0xff]
    %v278 = vld [vmem:[#allocation2 + $0x188] sm:$0xff]
    %v279 = vld [vmem:[#allocation2 + $0x190] sm:$0x11]
    %v280 = vld [vmem:[#allocation2 + $0x198] sm:$0x11]
    %v281 = vld [vmem:[#allocation2 + $0x1a0] sm:$0xff]
    %v282 = vld [vmem:[#allocation2 + $0x1a8] sm:$0xff]
    %v283 = vld [vmem:[#allocation2 + $0x1b0] sm:$0x11]
    %v284 = vld [vmem:[#allocation2 + $0x1b8] sm:$0x11]
    %v285 = vld [vmem:[#allocation2 + $0x1c0] sm:$0xff]
    %v286 = vld [vmem:[#allocation2 + $0x1c8] sm:$0xff]
    %v287 = vld [vmem:[#allocation2 + $0x1d0] sm:$0x11]
    %v288 = vld [vmem:[#allocation2 + $0x1d8] sm:$0x11]
    %v289 = vld [vmem:[#allocation2 + $0x1e0] sm:$0xff]
    %v290 = vld [vmem:[#allocation2 + $0x1e8] sm:$0xff]
    %v291 = vld [vmem:[#allocation2 + $0x1f0] sm:$0x11]
    %v292 = vld [vmem:[#allocation2 + $0x1f8] sm:$0x11]
    %v293 = vld [vmem:[#allocation2 + $0x200] sm:$0xff]
    %v294 = vld [vmem:[#allocation2 + $0x208] sm:$0xff]
    %v295 = vld [vmem:[#allocation2 + $0x210] sm:$0x11]
    %v296 = vld [vmem:[#allocation2 + $0x218] sm:$0x11]
    %v297 = vld [vmem:[#allocation2 + $0x220] sm:$0xff]
    %v298 = vld [vmem:[#allocation2 + $0x230] sm:$0x11]
    %v331 = vunpack.c.l.b16 %v231
    %v332 = vunpack.c.h.b16 %v231
    %v333 = vunpack.c.l.b16 %v232
    %v334 = vunpack.c.h.b16 %v232
    %v335 = vunpack.c.l.b16 %v235
    %v336 = vunpack.c.h.b16 %v235
    %v337 = vunpack.c.l.b16 %v236
    %v338 = vunpack.c.h.b16 %v236
    %v339 = vunpack.c.l.b16 %v239
    %v340 = vunpack.c.h.b16 %v239
    %v341 = vunpack.c.l.b16 %v240
    %v342 = vunpack.c.h.b16 %v240
    %v343 = vunpack.c.l.b16 %v243
    %v344 = vunpack.c.h.b16 %v243
    %v345 = vunpack.c.l.b16 %v244
    %v346 = vunpack.c.h.b16 %v244
    %v347 = vunpack.c.l.b16 %v247
    %v348 = vunpack.c.h.b16 %v247
    %v349 = vunpack.c.l.b16 %v248
    %v350 = vunpack.c.h.b16 %v248
    %v351 = vunpack.c.l.b16 %v251
    %v352 = vunpack.c.h.b16 %v251
    %v353 = vunpack.c.l.b16 %v252
    %v354 = vunpack.c.h.b16 %v252
    %v355 = vunpack.c.l.b16 %v255
    %v356 = vunpack.c.h.b16 %v255
    %v357 = vunpack.c.l.b16 %v256
    %v358 = vunpack.c.h.b16 %v256
    %v359 = vunpack.c.l.b16 %v259
    %v360 = vunpack.c.h.b16 %v259
    %v361 = vunpack.c.l.b16 %v260
    %v362 = vunpack.c.h.b16 %v260
    %v363 = vunpack.c.l.b16 %v265
    %v364 = vunpack.c.h.b16 %v265
    %v365 = vunpack.c.l.b16 %v266
    %v366 = vunpack.c.h.b16 %v266
    %v367 = vunpack.c.l.b16 %v269
    %v368 = vunpack.c.h.b16 %v269
    %v369 = vunpack.c.l.b16 %v270
    %v370 = vunpack.c.h.b16 %v270
    %v371 = vunpack.c.l.b16 %v273
    %v372 = vunpack.c.h.b16 %v273
    %v373 = vunpack.c.l.b16 %v274
    %v374 = vunpack.c.h.b16 %v274
    %v375 = vunpack.c.l.b16 %v277
    %v376 = vunpack.c.h.b16 %v277
    %v377 = vunpack.c.l.b16 %v278
    %v378 = vunpack.c.h.b16 %v278
    %v379 = vunpack.c.l.b16 %v281
    %v380 = vunpack.c.h.b16 %v281
    %v381 = vunpack.c.l.b16 %v282
    %v382 = vunpack.c.h.b16 %v282
    %v383 = vunpack.c.l.b16 %v285
    %v384 = vunpack.c.h.b16 %v285
    %v385 = vunpack.c.l.b16 %v286
    %v386 = vunpack.c.h.b16 %v286
    %v387 = vunpack.c.l.b16 %v289
    %v388 = vunpack.c.h.b16 %v289
    %v389 = vunpack.c.l.b16 %v290
    %v390 = vunpack.c.h.b16 %v290
    %v391 = vunpack.c.l.b16 %v293
    %v392 = vunpack.c.h.b16 %v293
    %v393 = vunpack.c.l.b16 %v294
    %v394 = vunpack.c.h.b16 %v294
    %v411 = vunpack.c.l.b16 %v233
    %v412 = vunpack.c.l.b16 %v237
    %v413 = vunpack.c.l.b16 %v241
    %v414 = vunpack.c.l.b16 %v245
    %v415 = vunpack.c.l.b16 %v249
    %v416 = vunpack.c.l.b16 %v253
    %v417 = vunpack.c.l.b16 %v257
    %v418 = vunpack.c.l.b16 %v261
    %v419 = vunpack.c.l.b16 %v267
    %v420 = vunpack.c.l.b16 %v271
    %v421 = vunpack.c.l.b16 %v275
    %v422 = vunpack.c.l.b16 %v279
    %v423 = vunpack.c.l.b16 %v283
    %v424 = vunpack.c.l.b16 %v287
    %v425 = vunpack.c.l.b16 %v291
    %v426 = vunpack.c.l.b16 %v295
    %v427 = vpack.c.b16 %v411, %v331
    %v428 = vpack.c.b16 %v412, %v335
    %v429 = vpack.c.b16 %v413, %v339
    %v430 = vpack.c.b16 %v414, %v343
    %v431 = vpack.c.b16 %v415, %v347
    %v432 = vpack.c.b16 %v416, %v351
    %v433 = vpack.c.b16 %v417, %v355
    %v434 = vpack.c.b16 %v418, %v359
    %v435 = vpack.c.b16 %v419, %v363
    %v436 = vpack.c.b16 %v420, %v367
    %v437 = vpack.c.b16 %v421, %v371
    %v438 = vpack.c.b16 %v422, %v375
    %v439 = vpack.c.b16 %v423, %v379
    %v440 = vpack.c.b16 %v424, %v383
    %v441 = vpack.c.b16 %v425, %v387
    %v442 = vpack.c.b16 %v426, %v391
    %v444 = vshrl.u32 %v427, 16
    %v446 = vshll.u32 %v427, 16
    %v448 = vrot.slane %v446, 1
    %v449 = vor.u32 %v444, %v448
    %v451 = vshrl.u32 %v428, 16
    %v453 = vshll.u32 %v428, 16
    %v455 = vrot.slane %v453, 1
    %v456 = vor.u32 %v451, %v455
    %v458 = vshrl.u32 %v429, 16
    %v460 = vshll.u32 %v429, 16
    %v462 = vrot.slane %v460, 1
    %v463 = vor.u32 %v458, %v462
    %v465 = vshrl.u32 %v430, 16
    %v467 = vshll.u32 %v430, 16
    %v469 = vrot.slane %v467, 1
    %v470 = vor.u32 %v465, %v469
    %v472 = vshrl.u32 %v431, 16
    %v474 = vshll.u32 %v431, 16
    %v476 = vrot.slane %v474, 1
    %v477 = vor.u32 %v472, %v476
    %v479 = vshrl.u32 %v432, 16
    %v481 = vshll.u32 %v432, 16
    %v483 = vrot.slane %v481, 1
    %v484 = vor.u32 %v479, %v483
    %v486 = vshrl.u32 %v433, 16
    %v488 = vshll.u32 %v433, 16
    %v490 = vrot.slane %v488, 1
    %v491 = vor.u32 %v486, %v490
    %v493 = vshrl.u32 %v434, 16
    %v495 = vshll.u32 %v434, 16
    %v497 = vrot.slane %v495, 1
    %v498 = vor.u32 %v493, %v497
    %v500 = vshrl.u32 %v435, 16
    %v502 = vshll.u32 %v435, 16
    %v504 = vrot.slane %v502, 1
    %v505 = vor.u32 %v500, %v504
    %v507 = vshrl.u32 %v436, 16
    %v509 = vshll.u32 %v436, 16
    %v511 = vrot.slane %v509, 1
    %v512 = vor.u32 %v507, %v511
    %v514 = vshrl.u32 %v437, 16
    %v516 = vshll.u32 %v437, 16
    %v518 = vrot.slane %v516, 1
    %v519 = vor.u32 %v514, %v518
    %v521 = vshrl.u32 %v438, 16
    %v523 = vshll.u32 %v438, 16
    %v525 = vrot.slane %v523, 1
    %v526 = vor.u32 %v521, %v525
    %v528 = vshrl.u32 %v439, 16
    %v530 = vshll.u32 %v439, 16
    %v532 = vrot.slane %v530, 1
    %v533 = vor.u32 %v528, %v532
    %v535 = vshrl.u32 %v440, 16
    %v537 = vshll.u32 %v440, 16
    %v539 = vrot.slane %v537, 1
    %v540 = vor.u32 %v535, %v539
    %v542 = vshrl.u32 %v441, 16
    %v544 = vshll.u32 %v441, 16
    %v546 = vrot.slane %v544, 1
    %v547 = vor.u32 %v542, %v546
    %v549 = vshrl.u32 %v442, 16
    %v551 = vshll.u32 %v442, 16
    %v553 = vrot.slane %v551, 1
    %v554 = vor.u32 %v549, %v553
    %v571 = vunpack.c.l.b16 %v234
    %v572 = vunpack.c.l.b16 %v238
    %v573 = vunpack.c.l.b16 %v242
    %v574 = vunpack.c.l.b16 %v246
    %v575 = vunpack.c.l.b16 %v250
    %v576 = vunpack.c.l.b16 %v254
    %v577 = vunpack.c.l.b16 %v258
    %v578 = vunpack.c.l.b16 %v262
    %v579 = vunpack.c.l.b16 %v268
    %v580 = vunpack.c.l.b16 %v272
    %v581 = vunpack.c.l.b16 %v276
    %v582 = vunpack.c.l.b16 %v280
    %v583 = vunpack.c.l.b16 %v284
    %v584 = vunpack.c.l.b16 %v288
    %v585 = vunpack.c.l.b16 %v292
    %v586 = vunpack.c.l.b16 %v296
    %v587 = vpack.c.b16 %v571, %v333
    %v588 = vpack.c.b16 %v572, %v337
    %v589 = vpack.c.b16 %v573, %v341
    %v590 = vpack.c.b16 %v574, %v345
    %v591 = vpack.c.b16 %v575, %v349
    %v592 = vpack.c.b16 %v576, %v353
    %v593 = vpack.c.b16 %v577, %v357
    %v594 = vpack.c.b16 %v578, %v361
    %v595 = vpack.c.b16 %v579, %v365
    %v596 = vpack.c.b16 %v580, %v369
    %v597 = vpack.c.b16 %v581, %v373
    %v598 = vpack.c.b16 %v582, %v377
    %v599 = vpack.c.b16 %v583, %v381
    %v600 = vpack.c.b16 %v584, %v385
    %v601 = vpack.c.b16 %v585, %v389
    %v602 = vpack.c.b16 %v586, %v393
    %v604 = vshrl.u32 %v587, 16
    %v606 = vshll.u32 %v587, 16
    %v608 = vrot.slane %v606, 1
    %v609 = vor.u32 %v604, %v608
    %v611 = vshrl.u32 %v588, 16
    %v613 = vshll.u32 %v588, 16
    %v615 = vrot.slane %v613, 1
    %v616 = vor.u32 %v611, %v615
    %v618 = vshrl.u32 %v589, 16
    %v620 = vshll.u32 %v589, 16
    %v622 = vrot.slane %v620, 1
    %v623 = vor.u32 %v618, %v622
    %v625 = vshrl.u32 %v590, 16
    %v627 = vshll.u32 %v590, 16
    %v629 = vrot.slane %v627, 1
    %v630 = vor.u32 %v625, %v629
    %v632 = vshrl.u32 %v591, 16
    %v634 = vshll.u32 %v591, 16
    %v636 = vrot.slane %v634, 1
    %v637 = vor.u32 %v632, %v636
    %v639 = vshrl.u32 %v592, 16
    %v641 = vshll.u32 %v592, 16
    %v643 = vrot.slane %v641, 1
    %v644 = vor.u32 %v639, %v643
    %v646 = vshrl.u32 %v593, 16
    %v648 = vshll.u32 %v593, 16
    %v650 = vrot.slane %v648, 1
    %v651 = vor.u32 %v646, %v650
    %v653 = vshrl.u32 %v594, 16
    %v655 = vshll.u32 %v594, 16
    %v657 = vrot.slane %v655, 1
    %v658 = vor.u32 %v653, %v657
    %v660 = vshrl.u32 %v595, 16
    %v662 = vshll.u32 %v595, 16
    %v664 = vrot.slane %v662, 1
    %v665 = vor.u32 %v660, %v664
    %v667 = vshrl.u32 %v596, 16
    %v669 = vshll.u32 %v596, 16
    %v671 = vrot.slane %v669, 1
    %v672 = vor.u32 %v667, %v671
    %v674 = vshrl.u32 %v597, 16
    %v676 = vshll.u32 %v597, 16
    %v678 = vrot.slane %v676, 1
    %v679 = vor.u32 %v674, %v678
    %v681 = vshrl.u32 %v598, 16
    %v683 = vshll.u32 %v598, 16
    %v685 = vrot.slane %v683, 1
    %v686 = vor.u32 %v681, %v685
    %v688 = vshrl.u32 %v599, 16
    %v690 = vshll.u32 %v599, 16
    %v692 = vrot.slane %v690, 1
    %v693 = vor.u32 %v688, %v692
    %v695 = vshrl.u32 %v600, 16
    %v697 = vshll.u32 %v600, 16
    %v699 = vrot.slane %v697, 1
    %v700 = vor.u32 %v695, %v699
    %v702 = vshrl.u32 %v601, 16
    %v704 = vshll.u32 %v601, 16
    %v706 = vrot.slane %v704, 1
    %v707 = vor.u32 %v702, %v706
    %v709 = vshrl.u32 %v602, 16
    %v711 = vshll.u32 %v602, 16
    %v713 = vrot.slane %v711, 1
    %v714 = vor.u32 %v709, %v713
    %v717 = vunpack.c.l.b16 %v263
    %v718 = vunpack.c.h.b16 %v263
    %v719 = vunpack.c.l.b16 %v297
    %v720 = vunpack.c.h.b16 %v297
    %v723 = vunpack.c.l.b16 %v264
    %v724 = vunpack.c.l.b16 %v298
    %v725 = vpack.c.b16 %v723, %v717
    %v726 = vpack.c.b16 %v724, %v719
    %v728 = vshrl.u32 %v725, 16
    %v730 = vshll.u32 %v725, 16
    %v732 = vrot.slane %v730, 1
    %v733 = vor.u32 %v728, %v732
    %v735 = vshrl.u32 %v726, 16
    %v737 = vshll.u32 %v726, 16
    %v739 = vrot.slane %v737, 1
    %v740 = vor.u32 %v735, %v739
    %v741 = vunpack.c.l.b16 %v449
    %v742 = vunpack.c.l.b16 %v609
    %v743 = vunpack.c.l.b16 %v456
    %v744 = vunpack.c.l.b16 %v616
    %v745 = vunpack.c.l.b16 %v463
    %v746 = vunpack.c.l.b16 %v623
    %v747 = vunpack.c.l.b16 %v470
    %v748 = vunpack.c.l.b16 %v630
    %v749 = vunpack.c.l.b16 %v477
    %v750 = vunpack.c.l.b16 %v637
    %v751 = vunpack.c.l.b16 %v484
    %v752 = vunpack.c.l.b16 %v644
    %v753 = vunpack.c.l.b16 %v491
    %v754 = vunpack.c.l.b16 %v651
    %v755 = vunpack.c.l.b16 %v498
    %v756 = vunpack.c.l.b16 %v658
    %v757 = vunpack.c.l.b16 %v733
    %v758 = vunpack.c.l.b16 %v505
    %v759 = vunpack.c.l.b16 %v665
    %v760 = vunpack.c.l.b16 %v512
    %v761 = vunpack.c.l.b16 %v672
    %v762 = vunpack.c.l.b16 %v519
    %v763 = vunpack.c.l.b16 %v679
    %v764 = vunpack.c.l.b16 %v526
    %v765 = vunpack.c.l.b16 %v686
    %v766 = vunpack.c.l.b16 %v533
    %v767 = vunpack.c.l.b16 %v693
    %v768 = vunpack.c.l.b16 %v540
    %v769 = vunpack.c.l.b16 %v700
    %v770 = vunpack.c.l.b16 %v547
    %v771 = vunpack.c.l.b16 %v707
    %v772 = vunpack.c.l.b16 %v554
    %v773 = vunpack.c.l.b16 %v714
    %v774 = vunpack.c.l.b16 %v740
    %v775 = vld [vmem:[%s1] sm:$0xf]
    %v776 = vld [vmem:[%s1 + $0x4] sm:$0xf]
    %v777 = vld [vmem:[%s1 + $0x8] sm:$0xf]
    %v778 = vld [vmem:[%s1 + $0xc] sm:$0xf]
    %v779 = vld [vmem:[%s1 + $0x10] sm:$0xf]
    %v780 = vld [vmem:[%s1 + $0x14] sm:$0xf]
    %v781 = vld [vmem:[%s1 + $0x18] sm:$0xf]
    %v782 = vld [vmem:[%s1 + $0x1c] sm:$0xf]
    %v783 = vld [vmem:[%s1 + $0x20] sm:$0xf]
    %v784 = vld [vmem:[%s1 + $0x24] sm:$0xf]
    %v785 = vld [vmem:[%s1 + $0x28] sm:$0xf]
    %v786 = vld [vmem:[%s1 + $0x2c] sm:$0xf]
    %v787 = vld [vmem:[%s1 + $0x30] sm:$0xf]
    %v788 = vld [vmem:[%s1 + $0x34] sm:$0xf]
    %v789 = vld [vmem:[%s1 + $0x38] sm:$0xf]
    %v790 = vld [vmem:[%s1 + $0x3c] sm:$0xf]
    %v791 = vld [vmem:[%s1 + $0x40] sm:$0xf]
    %v792 = vld [vmem:[%s1 + $0x44] sm:$0xf]
    %v793 = vld [vmem:[%s1 + $0x48] sm:$0xf]
    %v794 = vld [vmem:[%s1 + $0x4c] sm:$0xf]
    %v795 = vld [vmem:[%s1 + $0x50] sm:$0xf]
    %v796 = vld [vmem:[%s1 + $0x54] sm:$0xf]
    %v797 = vld [vmem:[%s1 + $0x58] sm:$0xf]
    %v798 = vld [vmem:[%s1 + $0x5c] sm:$0xf]
    %v799 = vld [vmem:[%s1 + $0x60] sm:$0xf]
    %v800 = vld [vmem:[%s1 + $0x64] sm:$0xf]
    %v801 = vld [vmem:[%s1 + $0x68] sm:$0xf]
    %v802 = vld [vmem:[%s1 + $0x6c] sm:$0xf]
    %v803 = vld [vmem:[%s1 + $0x70] sm:$0xf]
    %v804 = vld [vmem:[%s1 + $0x74] sm:$0xf]
    %v805 = vld [vmem:[%s1 + $0x78] sm:$0xf]
    %v806 = vld [vmem:[%s1 + $0x7c] sm:$0xf]
    %v807 = vld [vmem:[%s1 + $0x80] sm:$0xf]
    %v808 = vld [vmem:[%s1 + $0x84] sm:$0xf]
    %v809 = vld [vmem:[%s1 + $0x88] sm:$0xf]
    %v810 = vld [vmem:[%s1 + $0x8c] sm:$0xf]
    %v811 = vld [vmem:[%s1 + $0x90] sm:$0xf]
    %v812 = vld [vmem:[%s1 + $0x94] sm:$0xf]
    %v813 = vld [vmem:[%s1 + $0x98] sm:$0xf]
    %v814 = vld [vmem:[%s1 + $0x9c] sm:$0xf]
    %v815 = vld [vmem:[%s1 + $0xa0] sm:$0xf]
    %v816 = vld [vmem:[%s1 + $0xa4] sm:$0xf]
    %v817 = vld [vmem:[%s1 + $0xa8] sm:$0xf]
    %v818 = vld [vmem:[%s1 + $0xac] sm:$0xf]
    %v819 = vld [vmem:[%s1 + $0xb0] sm:$0xf]
    %v820 = vld [vmem:[%s1 + $0xb4] sm:$0xf]
    %v821 = vld [vmem:[%s1 + $0xb8] sm:$0xf]
    %v822 = vld [vmem:[%s1 + $0xbc] sm:$0xf]
    %v823 = vld [vmem:[%s1 + $0xc0] sm:$0xf]
    %v824 = vld [vmem:[%s1 + $0xc4] sm:$0xf]
    %v825 = vld [vmem:[%s1 + $0xc8] sm:$0xf]
    %v826 = vld [vmem:[%s1 + $0xcc] sm:$0xf]
    %v827 = vld [vmem:[%s1 + $0xd0] sm:$0xf]
    %v828 = vld [vmem:[%s1 + $0xd4] sm:$0xf]
    %v829 = vld [vmem:[%s1 + $0xd8] sm:$0xf]
    %v830 = vld [vmem:[%s1 + $0xdc] sm:$0xf]
    %v831 = vld [vmem:[%s1 + $0xe0] sm:$0xf]
    %v832 = vld [vmem:[%s1 + $0xe4] sm:$0xf]
    %v833 = vld [vmem:[%s1 + $0xe8] sm:$0xf]
    %v834 = vld [vmem:[%s1 + $0xec] sm:$0xf]
    %v835 = vld [vmem:[%s1 + $0xf0] sm:$0xf]
    %v836 = vld [vmem:[%s1 + $0xf4] sm:$0xf]
    %v837 = vld [vmem:[%s1 + $0xf8] sm:$0xf]
    %v838 = vld [vmem:[%s1 + $0xfc] sm:$0xf]
    %v839 = vld [vmem:[%s1 + $0x100] sm:$0xf]
    %v840 = vld [vmem:[%s1 + $0x104] sm:$0xf]
    %v841 = vld [vmem:[%s1 + $0x108] sm:$0xf]
    %v842 = vld [vmem:[%s1 + $0x10c] sm:$0xf]
    %v843 = vld [vmem:[%s1 + $0x110] sm:$0xf]
    %v844 = vld [vmem:[%s1 + $0x114] sm:$0xf]
    %v845 = vld [vmem:[%s1 + $0x118] sm:$0xf]
    %v846 = vld [vmem:[%s1 + $0x11c] sm:$0xf]
    %v847 = vld [vmem:[%s1 + $0x120] sm:$0xf]
    %v848 = vld [vmem:[%s1 + $0x124] sm:$0xf]
    %v849 = vld [vmem:[%s1 + $0x128] sm:$0xf]
    %v850 = vld [vmem:[%s1 + $0x12c] sm:$0xf]
    %v851 = vld [vmem:[%s1 + $0x130] sm:$0xf]
    %v852 = vld [vmem:[%s1 + $0x134] sm:$0xf]
    %v853 = vld [vmem:[%s1 + $0x138] sm:$0xf]
    %v854 = vld [vmem:[%s1 + $0x13c] sm:$0xf]
    %v855 = vld [vmem:[%s1 + $0x140] sm:$0xf]
    %v856 = vld [vmem:[%s1 + $0x144] sm:$0xf]
    %v857 = vld [vmem:[%s1 + $0x148] sm:$0xf]
    %v858 = vld [vmem:[%s1 + $0x14c] sm:$0xf]
    %v859 = vld [vmem:[%s1 + $0x150] sm:$0xf]
    %v860 = vld [vmem:[%s1 + $0x154] sm:$0xf]
    %v861 = vld [vmem:[%s1 + $0x158] sm:$0xf]
    %v862 = vld [vmem:[%s1 + $0x15c] sm:$0xf]
    %v863 = vld [vmem:[%s1 + $0x160] sm:$0xf]
    %v864 = vld [vmem:[%s1 + $0x164] sm:$0xf]
    %v865 = vld [vmem:[%s1 + $0x168] sm:$0xf]
    %v866 = vld [vmem:[%s1 + $0x16c] sm:$0xf]
    %v867 = vld [vmem:[%s1 + $0x170] sm:$0xf]
    %v868 = vld [vmem:[%s1 + $0x174] sm:$0xf]
    %v869 = vld [vmem:[%s1 + $0x178] sm:$0xf]
    %v870 = vld [vmem:[%s1 + $0x17c] sm:$0xf]
    %v871 = vld [vmem:[%s1 + $0x180] sm:$0xf]
    %v872 = vld [vmem:[%s1 + $0x184] sm:$0xf]
    %v873 = vld [vmem:[%s1 + $0x188] sm:$0xf]
    %v874 = vld [vmem:[%s1 + $0x18c] sm:$0xf]
    %v875 = vld [vmem:[%s1 + $0x190] sm:$0xf]
    %v876 = vld [vmem:[%s1 + $0x194] sm:$0xf]
    %v877 = vld [vmem:[%s1 + $0x198] sm:$0xf]
    %v878 = vld [vmem:[%s1 + $0x19c] sm:$0xf]
    %v879 = vld [vmem:[%s1 + $0x1a0] sm:$0xf]
    %v880 = vld [vmem:[%s1 + $0x1a4] sm:$0xf]
    %v881 = vld [vmem:[%s1 + $0x1a8] sm:$0xf]
    %v882 = vld [vmem:[%s1 + $0x1ac] sm:$0xf]
    %v883 = vld [vmem:[%s1 + $0x1b0] sm:$0xf]
    %v884 = vld [vmem:[%s1 + $0x1b4] sm:$0xf]
    %v885 = vld [vmem:[%s1 + $0x1b8] sm:$0xf]
    %v886 = vld [vmem:[%s1 + $0x1bc] sm:$0xf]
    %v887 = vld [vmem:[%s1 + $0x1c0] sm:$0xf]
    %v888 = vld [vmem:[%s1 + $0x1c4] sm:$0xf]
    %v889 = vld [vmem:[%s1 + $0x1c8] sm:$0xf]
    %v890 = vld [vmem:[%s1 + $0x1cc] sm:$0xf]
    %v891 = vld [vmem:[%s1 + $0x1d0] sm:$0xf]
    %v892 = vld [vmem:[%s1 + $0x1d4] sm:$0xf]
    %v893 = vld [vmem:[%s1 + $0x1d8] sm:$0xf]
    %v894 = vld [vmem:[%s1 + $0x1dc] sm:$0xf]
    %v895 = vld [vmem:[%s1 + $0x1e0] sm:$0xf]
    %v896 = vld [vmem:[%s1 + $0x1e4] sm:$0xf]
    %v897 = vld [vmem:[%s1 + $0x1e8] sm:$0xf]
    %v898 = vld [vmem:[%s1 + $0x1ec] sm:$0xf]
    %v899 = vld [vmem:[%s1 + $0x1f0] sm:$0xf]
    %v900 = vld [vmem:[%s1 + $0x1f4] sm:$0xf]
    %v901 = vld [vmem:[%s1 + $0x1f8] sm:$0xf]
    %v902 = vld [vmem:[%s1 + $0x1fc] sm:$0xf]
    %v903 = vld [vmem:[%s1 + $0x200] sm:$0xf]
    %v904 = vld [vmem:[%s1 + $0x204] sm:$0xf]
    %v905 = vld [vmem:[%s1 + $0x208] sm:$0xf]
    %v906 = vld [vmem:[%s1 + $0x20c] sm:$0xf]
    %v907 = vld [vmem:[%s1 + $0x210] sm:$0xf]
    %v908 = vld [vmem:[%s1 + $0x214] sm:$0xf]
    %v909 = vld [vmem:[%s1 + $0x218] sm:$0xf]
    %v910 = vld [vmem:[%s1 + $0x21c] sm:$0xf]
    %v911 = vld [vmem:[%s1 + $0x220] sm:$0xf]
    %v912 = vld [vmem:[%s1 + $0x224] sm:$0xf]
    %v913 = vld [vmem:[%s1 + $0x228] sm:$0xf]
    %v914 = vld [vmem:[%s1 + $0x22c] sm:$0xf]
    %v915 = vld [vmem:[%s1 + $0x230] sm:$0xf]
    %v916 = vld [vmem:[%s1 + $0x234] sm:$0xf]
    %v917 = vld [vmem:[%s1 + $0x238] sm:$0xf]
    %v918 = vld [vmem:[%s1 + $0x23c] sm:$0xf]
    %v919 = vld [vmem:[%s2] sm:$0x1]
    %v921 = vlaneseq
    %v922 = vshrl.u32 %v921, 7
    %v923 = vsub.s32 0, %v922
    %v924 = vrot.slane %v919, %v923
    %v926 = vpack.c.b16 %v335, %v331
    %v927 = vpack.c.b16 %v336, %v332
    %v928 = vpack.c.b16 %v337, %v333
    %v929 = vpack.c.b16 %v338, %v334
    %v930 = vpack.c.b16 %v743, %v741
    %v931 = vpack.c.b16 %v744, %v742
    %v932 = vpack.c.b16 %v339, %v335
    %v933 = vpack.c.b16 %v340, %v336
    %v934 = vpack.c.b16 %v745, %v743
    %v935 = vpack.c.b16 %v343, %v339
    %v936 = vpack.c.b16 %v344, %v340
    %v937 = vpack.c.b16 %v345, %v341
    %v938 = vpack.c.b16 %v346, %v342
    %v939 = vpack.c.b16 %v747, %v745
    %v940 = vpack.c.b16 %v748, %v746
    %v941 = vpack.c.b16 %v347, %v343
    %v942 = vpack.c.b16 %v348, %v344
    %v943 = vpack.c.b16 %v749, %v747
    %v944 = vpack.c.b16 %v351, %v347
    %v945 = vpack.c.b16 %v352, %v348
    %v946 = vpack.c.b16 %v353, %v349
    %v947 = vpack.c.b16 %v354, %v350
    %v948 = vpack.c.b16 %v751, %v749
    %v949 = vpack.c.b16 %v752, %v750
    %v950 = vpack.c.b16 %v355, %v351
    %v951 = vpack.c.b16 %v356, %v352
    %v952 = vpack.c.b16 %v753, %v751
    %v953 = vpack.c.b16 %v359, %v355
    %v954 = vpack.c.b16 %v360, %v356
    %v955 = vpack.c.b16 %v361, %v357
    %v956 = vpack.c.b16 %v362, %v358
    %v957 = vpack.c.b16 %v755, %v753
    %v958 = vpack.c.b16 %v756, %v754
    %v959 = vpack.c.b16 %v717, %v359
    %v960 = vpack.c.b16 %v718, %v360
    %v961 = vpack.c.b16 %v757, %v755
    %v962 = vpack.c.b16 %v367, %v363
    %v963 = vpack.c.b16 %v368, %v364
    %v964 = vpack.c.b16 %v369, %v365
    %v965 = vpack.c.b16 %v370, %v366
    %v966 = vpack.c.b16 %v760, %v758
    %v967 = vpack.c.b16 %v761, %v759
    %v968 = vpack.c.b16 %v371, %v367
    %v969 = vpack.c.b16 %v372, %v368
    %v970 = vpack.c.b16 %v762, %v760
    %v971 = vpack.c.b16 %v375, %v371
    %v972 = vpack.c.b16 %v376, %v372
    %v973 = vpack.c.b16 %v377, %v373
    %v974 = vpack.c.b16 %v378, %v374
    %v975 = vpack.c.b16 %v764, %v762
    %v976 = vpack.c.b16 %v765, %v763
    %v977 = vpack.c.b16 %v379, %v375
    %v978 = vpack.c.b16 %v380, %v376
    %v979 = vpack.c.b16 %v766, %v764
    %v980 = vpack.c.b16 %v383, %v379
    %v981 = vpack.c.b16 %v384, %v380
    %v982 = vpack.c.b16 %v385, %v381
    %v983 = vpack.c.b16 %v386, %v382
    %v984 = vpack.c.b16 %v768, %v766
    %v985 = vpack.c.b16 %v769, %v767
    %v986 = vpack.c.b16 %v387, %v383
    %v987 = vpack.c.b16 %v388, %v384
    %v988 = vpack.c.b16 %v770, %v768
    %v989 = vpack.c.b16 %v391, %v387
    %v990 = vpack.c.b16 %v392, %v388
    %v991 = vpack.c.b16 %v393, %v389
    %v992 = vpack.c.b16 %v394, %v390
    %v993 = vpack.c.b16 %v772, %v770
    %v994 = vpack.c.b16 %v773, %v771
    %v995 = vpack.c.b16 %v719, %v391
    %v996 = vpack.c.b16 %v720, %v392
    %v997 = vpack.c.b16 %v774, %v772
    %v1214 = vunpack.c.l.b16 %v775
    %v1215 = vunpack.c.l.b16 %v776
    %v1216 = vunpack.c.l.b16 %v777
    %v1217 = vunpack.c.l.b16 %v778
    %v1218 = vunpack.c.l.b16 %v779
    %v1219 = vunpack.c.l.b16 %v780
    %v1220 = vunpack.c.l.b16 %v781
    %v1221 = vunpack.c.l.b16 %v782
    %v1222 = vunpack.c.l.b16 %v783
    %v1223 = vunpack.c.l.b16 %v784
    %v1224 = vunpack.c.l.b16 %v785
    %v1225 = vunpack.c.l.b16 %v786
    %v1226 = vunpack.c.l.b16 %v787
    %v1227 = vunpack.c.l.b16 %v788
    %v1228 = vunpack.c.l.b16 %v789
    %v1229 = vunpack.c.l.b16 %v790
    %v1230 = vunpack.c.l.b16 %v791
    %v1231 = vunpack.c.l.b16 %v792
    %v1232 = vunpack.c.l.b16 %v793
    %v1233 = vunpack.c.l.b16 %v794
    %v1234 = vunpack.c.l.b16 %v795
    %v1235 = vunpack.c.l.b16 %v796
    %v1236 = vunpack.c.l.b16 %v797
    %v1237 = vunpack.c.l.b16 %v798
    %v1238 = vunpack.c.l.b16 %v799
    %v1239 = vunpack.c.l.b16 %v800
    %v1240 = vunpack.c.l.b16 %v801
    %v1241 = vunpack.c.l.b16 %v802
    %v1242 = vunpack.c.l.b16 %v803
    %v1243 = vunpack.c.l.b16 %v804
    %v1244 = vunpack.c.l.b16 %v805
    %v1245 = vunpack.c.l.b16 %v806
    %v1246 = vunpack.c.l.b16 %v807
    %v1247 = vunpack.c.l.b16 %v808
    %v1248 = vunpack.c.l.b16 %v809
    %v1249 = vunpack.c.l.b16 %v810
    %v1250 = vunpack.c.l.b16 %v811
    %v1251 = vunpack.c.l.b16 %v812
    %v1252 = vunpack.c.l.b16 %v813
    %v1253 = vunpack.c.l.b16 %v814
    %v1254 = vunpack.c.l.b16 %v815
    %v1255 = vunpack.c.l.b16 %v816
    %v1256 = vunpack.c.l.b16 %v817
    %v1257 = vunpack.c.l.b16 %v818
    %v1258 = vunpack.c.l.b16 %v819
    %v1259 = vunpack.c.l.b16 %v820
    %v1260 = vunpack.c.l.b16 %v821
    %v1261 = vunpack.c.l.b16 %v822
    %v1262 = vunpack.c.l.b16 %v823
    %v1263 = vunpack.c.l.b16 %v824
    %v1264 = vunpack.c.l.b16 %v825
    %v1265 = vunpack.c.l.b16 %v826
    %v1266 = vunpack.c.l.b16 %v827
    %v1267 = vunpack.c.l.b16 %v828
    %v1268 = vunpack.c.l.b16 %v829
    %v1269 = vunpack.c.l.b16 %v830
    %v1270 = vunpack.c.l.b16 %v831
    %v1271 = vunpack.c.l.b16 %v832
    %v1272 = vunpack.c.l.b16 %v833
    %v1273 = vunpack.c.l.b16 %v834
    %v1274 = vunpack.c.l.b16 %v835
    %v1275 = vunpack.c.l.b16 %v836
    %v1276 = vunpack.c.l.b16 %v837
    %v1277 = vunpack.c.l.b16 %v838
    %v1278 = vunpack.c.l.b16 %v839
    %v1279 = vunpack.c.l.b16 %v840
    %v1280 = vunpack.c.l.b16 %v841
    %v1281 = vunpack.c.l.b16 %v842
    %v1282 = vunpack.c.l.b16 %v843
    %v1283 = vunpack.c.l.b16 %v844
    %v1284 = vunpack.c.l.b16 %v845
    %v1285 = vunpack.c.l.b16 %v846
    %v1286 = vunpack.c.l.b16 %v847
    %v1287 = vunpack.c.l.b16 %v848
    %v1288 = vunpack.c.l.b16 %v849
    %v1289 = vunpack.c.l.b16 %v850
    %v1290 = vunpack.c.l.b16 %v851
    %v1291 = vunpack.c.l.b16 %v852
    %v1292 = vunpack.c.l.b16 %v853
    %v1293 = vunpack.c.l.b16 %v854
    %v1294 = vunpack.c.l.b16 %v855
    %v1295 = vunpack.c.l.b16 %v856
    %v1296 = vunpack.c.l.b16 %v857
    %v1297 = vunpack.c.l.b16 %v858
    %v1298 = vunpack.c.l.b16 %v859
    %v1299 = vunpack.c.l.b16 %v860
    %v1300 = vunpack.c.l.b16 %v861
    %v1301 = vunpack.c.l.b16 %v862
    %v1302 = vunpack.c.l.b16 %v863
    %v1303 = vunpack.c.l.b16 %v864
    %v1304 = vunpack.c.l.b16 %v865
    %v1305 = vunpack.c.l.b16 %v866
    %v1306 = vunpack.c.l.b16 %v867
    %v1307 = vunpack.c.l.b16 %v868
    %v1308 = vunpack.c.l.b16 %v869
    %v1309 = vunpack.c.l.b16 %v870
    %v1310 = vunpack.c.l.b16 %v871
    %v1311 = vunpack.c.l.b16 %v872
    %v1312 = vunpack.c.l.b16 %v873
    %v1313 = vunpack.c.l.b16 %v874
    %v1314 = vunpack.c.l.b16 %v875
    %v1315 = vunpack.c.l.b16 %v876
    %v1316 = vunpack.c.l.b16 %v877
    %v1317 = vunpack.c.l.b16 %v878
    %v1318 = vunpack.c.l.b16 %v879
    %v1319 = vunpack.c.l.b16 %v880
    %v1320 = vunpack.c.l.b16 %v881
    %v1321 = vunpack.c.l.b16 %v882
    %v1322 = vunpack.c.l.b16 %v883
    %v1323 = vunpack.c.l.b16 %v884
    %v1324 = vunpack.c.l.b16 %v885
    %v1325 = vunpack.c.l.b16 %v886
    %v1326 = vunpack.c.l.b16 %v887
    %v1327 = vunpack.c.l.b16 %v888
    %v1328 = vunpack.c.l.b16 %v889
    %v1329 = vunpack.c.l.b16 %v890
    %v1330 = vunpack.c.l.b16 %v891
    %v1331 = vunpack.c.l.b16 %v892
    %v1332 = vunpack.c.l.b16 %v893
    %v1333 = vunpack.c.l.b16 %v894
    %v1334 = vunpack.c.l.b16 %v895
    %v1335 = vunpack.c.l.b16 %v896
    %v1336 = vunpack.c.l.b16 %v897
    %v1337 = vunpack.c.l.b16 %v898
    %v1338 = vunpack.c.l.b16 %v899
    %v1339 = vunpack.c.l.b16 %v900
    %v1340 = vunpack.c.l.b16 %v901
    %v1341 = vunpack.c.l.b16 %v902
    %v1342 = vunpack.c.l.b16 %v903
    %v1343 = vunpack.c.l.b16 %v904
    %v1344 = vunpack.c.l.b16 %v905
    %v1345 = vunpack.c.l.b16 %v906
    %v1346 = vunpack.c.l.b16 %v907
    %v1347 = vunpack.c.l.b16 %v908
    %v1348 = vunpack.c.l.b16 %v909
    %v1349 = vunpack.c.l.b16 %v910
    %v1350 = vunpack.c.l.b16 %v911
    %v1351 = vunpack.c.l.b16 %v912
    %v1352 = vunpack.c.l.b16 %v913
    %v1353 = vunpack.c.l.b16 %v914
    %v1354 = vunpack.c.l.b16 %v915
    %v1355 = vunpack.c.l.b16 %v916
    %v1356 = vunpack.c.l.b16 %v917
    %v1357 = vunpack.c.l.b16 %v918
    %v1358 = vpack.c.b16 %v1215, %v1214
    %v1359 = vpack.c.b16 %v1217, %v1216
    %v1360 = vpack.c.b16 %v1219, %v1218
    %v1361 = vpack.c.b16 %v1221, %v1220
    %v1362 = vpack.c.b16 %v1223, %v1222
    %v1363 = vpack.c.b16 %v1225, %v1224
    %v1364 = vpack.c.b16 %v1227, %v1226
    %v1365 = vpack.c.b16 %v1229, %v1228
    %v1366 = vpack.c.b16 %v1231, %v1230
    %v1367 = vpack.c.b16 %v1233, %v1232
    %v1368 = vpack.c.b16 %v1235, %v1234
    %v1369 = vpack.c.b16 %v1237, %v1236
    %v1370 = vpack.c.b16 %v1239, %v1238
    %v1371 = vpack.c.b16 %v1241, %v1240
    %v1372 = vpack.c.b16 %v1243, %v1242
    %v1373 = vpack.c.b16 %v1245, %v1244
    %v1374 = vpack.c.b16 %v1247, %v1246
    %v1375 = vpack.c.b16 %v1249, %v1248
    %v1376 = vpack.c.b16 %v1251, %v1250
    %v1377 = vpack.c.b16 %v1253, %v1252
    %v1378 = vpack.c.b16 %v1255, %v1254
    %v1379 = vpack.c.b16 %v1257, %v1256
    %v1380 = vpack.c.b16 %v1259, %v1258
    %v1381 = vpack.c.b16 %v1261, %v1260
    %v1382 = vpack.c.b16 %v1263, %v1262
    %v1383 = vpack.c.b16 %v1265, %v1264
    %v1384 = vpack.c.b16 %v1267, %v1266
    %v1385 = vpack.c.b16 %v1269, %v1268
    %v1386 = vpack.c.b16 %v1271, %v1270
    %v1387 = vpack.c.b16 %v1273, %v1272
    %v1388 = vpack.c.b16 %v1275, %v1274
    %v1389 = vpack.c.b16 %v1277, %v1276
    %v1390 = vpack.c.b16 %v1279, %v1278
    %v1391 = vpack.c.b16 %v1281, %v1280
    %v1392 = vpack.c.b16 %v1283, %v1282
    %v1393 = vpack.c.b16 %v1285, %v1284
    %v1394 = vpack.c.b16 %v1287, %v1286
    %v1395 = vpack.c.b16 %v1289, %v1288
    %v1396 = vpack.c.b16 %v1291, %v1290
    %v1397 = vpack.c.b16 %v1293, %v1292
    %v1398 = vpack.c.b16 %v1295, %v1294
    %v1399 = vpack.c.b16 %v1297, %v1296
    %v1400 = vpack.c.b16 %v1299, %v1298
    %v1401 = vpack.c.b16 %v1301, %v1300
    %v1402 = vpack.c.b16 %v1303, %v1302
    %v1403 = vpack.c.b16 %v1305, %v1304
    %v1404 = vpack.c.b16 %v1307, %v1306
    %v1405 = vpack.c.b16 %v1309, %v1308
    %v1406 = vpack.c.b16 %v1311, %v1310
    %v1407 = vpack.c.b16 %v1313, %v1312
    %v1408 = vpack.c.b16 %v1315, %v1314
    %v1409 = vpack.c.b16 %v1317, %v1316
    %v1410 = vpack.c.b16 %v1319, %v1318
    %v1411 = vpack.c.b16 %v1321, %v1320
    %v1412 = vpack.c.b16 %v1323, %v1322
    %v1413 = vpack.c.b16 %v1325, %v1324
    %v1414 = vpack.c.b16 %v1327, %v1326
    %v1415 = vpack.c.b16 %v1329, %v1328
    %v1416 = vpack.c.b16 %v1331, %v1330
    %v1417 = vpack.c.b16 %v1333, %v1332
    %v1418 = vpack.c.b16 %v1335, %v1334
    %v1419 = vpack.c.b16 %v1337, %v1336
    %v1420 = vpack.c.b16 %v1339, %v1338
    %v1421 = vpack.c.b16 %v1341, %v1340
    %v1422 = vpack.c.b16 %v1343, %v1342
    %v1423 = vpack.c.b16 %v1345, %v1344
    %v1424 = vpack.c.b16 %v1347, %v1346
    %v1425 = vpack.c.b16 %v1349, %v1348
    %v1426 = vpack.c.b16 %v1351, %v1350
    %v1427 = vpack.c.b16 %v1353, %v1352
    %v1428 = vpack.c.b16 %v1355, %v1354
    %v1429 = vpack.c.b16 %v1357, %v1356
    %1502 = vmatprep.subr.bf16.mxu0 0
    %1503 = vmatpush1.bf16.msra.mxu0 %v1358
    %1504 = vmatprep.subr.bf16.mxu0 0
    %1505 = vmatpush1.bf16.msra.mxu0 %v1359
    %1506 = vmatprep.subr.bf16.mxu0 0
    %1507 = vmatpush1.bf16.msra.mxu0 %v1360
    %1508 = vmatprep.subr.bf16.mxu0 0
    %1509 = vmatpush1.bf16.msra.mxu0 %v1361
    %1510 = vmatprep.subr.bf16.mxu0 0
    %1511 = vmatpush1.bf16.msra.mxu0 %v1362
    %1512 = vmatprep.subr.bf16.mxu0 0
    %1513 = vmatpush1.bf16.msra.mxu0 %v1363
    %1514 = vmatprep.subr.bf16.mxu0 0
    %1515 = vmatpush1.bf16.msra.mxu0 %v1364
    %1516 = vmatprep.subr.bf16.mxu0 0
    %1517 = vmatpush1.bf16.msra.mxu0 %v1365
    %1518 = vmatprep.subr.bf16.mxu0 0
    %1519 = vmatpush1.bf16.msra.mxu0 %v1366
    %1520 = vmatprep.subr.bf16.mxu0 0
    %1521 = vmatpush1.bf16.msra.mxu0 %v1367
    %1522 = vmatprep.subr.bf16.mxu0 0
    %1523 = vmatpush1.bf16.msra.mxu0 %v1368
    %1524 = vmatprep.subr.bf16.mxu0 0
    %1525 = vmatpush1.bf16.msra.mxu0 %v1369
    %1526 = vmatprep.subr.bf16.mxu0 0
    %1527 = vmatpush1.bf16.msra.mxu0 %v1370
    %1528 = vmatprep.subr.bf16.mxu0 0
    %1529 = vmatpush1.bf16.msra.mxu0 %v1371
    %1530 = vmatprep.subr.bf16.mxu0 0
    %1531 = vmatpush1.bf16.msra.mxu0 %v1372
    %1532 = vmatprep.subr.bf16.mxu0 0
    %1533 = vmatpush1.bf16.msra.mxu0 %v1373
    %1534 = vmatprep.mubr.bf16.mxu0 %v927
    %1535 = vmatmul.mubr.bf16.gmra.mrb[0].mxu0 %v926
    %v1536 = vpop.f32.mrb[0].mxu0
    %v1537 = vadd.f32 %v924, %v1536
    %v1538 = vpop.f32.mrb[0].mxu0
    %v1539 = vpop.f32.mrb[0].mxu0
    %v1540 = vadd.f32 %v924, %v1539
    %v1541 = vpop.f32.mrb[0].mxu0
    %1542 = vmatprep.mubr.bf16.mxu0 %v936
    %1543 = vmatmul.mubr.bf16.gmra.mrb[0].mxu0 %v935
    %v1544 = vpop.f32.mrb[0].mxu0
    %v1545 = vadd.f32 %v924, %v1544
    %v1546 = vpop.f32.mrb[0].mxu0
    %v1547 = vpop.f32.mrb[0].mxu0
    %v1548 = vadd.f32 %v924, %v1547
    %v1549 = vpop.f32.mrb[0].mxu0
    %1550 = vmatprep.mubr.bf16.mxu0 %v945
    %1551 = vmatmul.mubr.bf16.gmra.mrb[0].mxu0 %v944
    %v1552 = vpop.f32.mrb[0].mxu0
    %v1553 = vadd.f32 %v924, %v1552
    %v1554 = vpop.f32.mrb[0].mxu0
    %v1555 = vpop.f32.mrb[0].mxu0
    %v1556 = vadd.f32 %v924, %v1555
    %v1557 = vpop.f32.mrb[0].mxu0
    %1558 = vmatprep.mubr.bf16.mxu0 %v954
    %1559 = vmatmul.mubr.bf16.gmra.mrb[0].mxu0 %v953
    %v1560 = vpop.f32.mrb[0].mxu0
    %v1561 = vadd.f32 %v924, %v1560
    %v1562 = vpop.f32.mrb[0].mxu0
    %v1563 = vpop.f32.mrb[0].mxu0
    %v1564 = vadd.f32 %v924, %v1563
    %v1565 = vpop.f32.mrb[0].mxu0
    %1566 = vmatprep.mubr.bf16.mxu0 %v963
    %1567 = vmatmul.mubr.bf16.gmra.mrb[0].mxu0 %v962
    %v1568 = vpop.f32.mrb[0].mxu0
    %v1569 = vadd.f32 %v924, %v1568
    %v1570 = vpop.f32.mrb[0].mxu0
    %v1571 = vpop.f32.mrb[0].mxu0
    %v1572 = vadd.f32 %v924, %v1571
    %v1573 = vpop.f32.mrb[0].mxu0
    %1574 = vmatprep.mubr.bf16.mxu0 %v972
    %1575 = vmatmul.mubr.bf16.gmra.mrb[0].mxu0 %v971
    %v1576 = vpop.f32.mrb[0].mxu0
    %v1577 = vadd.f32 %v924, %v1576
    %v1578 = vpop.f32.mrb[0].mxu0
    %v1579 = vpop.f32.mrb[0].mxu0
    %v1580 = vadd.f32 %v924, %v1579
    %v1581 = vpop.f32.mrb[0].mxu0
    %1582 = vmatprep.mubr.bf16.mxu0 %v981
    %1583 = vmatmul.mubr.bf16.gmra.mrb[0].mxu0 %v980
    %v1584 = vpop.f32.mrb[0].mxu0
    %v1585 = vadd.f32 %v924, %v1584
    %v1586 = vpop.f32.mrb[0].mxu0
    %v1587 = vpop.f32.mrb[0].mxu0
    %v1588 = vadd.f32 %v924, %v1587
    %v1589 = vpop.f32.mrb[0].mxu0
    %1590 = vmatprep.mubr.bf16.mxu0 %v990
    %1591 = vmatmul.mubr.bf16.gmra.mrb[0].mxu0 %v989
    %v1592 = vpop.f32.mrb[0].mxu0
    %v1593 = vadd.f32 %v924, %v1592
    %v1594 = vpop.f32.mrb[0].mxu0
    %v1595 = vpop.f32.mrb[0].mxu0
    %v1596 = vadd.f32 %v924, %v1595
    %v1597 = vpop.f32.mrb[0].mxu0
    %1598 = vdwg.mxu0
    %1599 = vmatprep.subr.bf16.mxu0 0
    %1600 = vmatpush1.bf16.msra.mxu0 %v1374
    %1601 = vmatprep.subr.bf16.mxu0 0
    %1602 = vmatpush1.bf16.msra.mxu0 %v1375
    %1603 = vmatprep.subr.bf16.mxu0 0
    %1604 = vmatpush1.bf16.msra.mxu0 %v1376
    %1605 = vmatprep.subr.bf16.mxu0 0
    %1606 = vmatpush1.bf16.msra.mxu0 %v1377
    %1607 = vmatprep.subr.bf16.mxu0 0
    %1608 = vmatpush1.bf16.msra.mxu0 %v1378
    %1609 = vmatprep.subr.bf16.mxu0 0
    %1610 = vmatpush1.bf16.msra.mxu0 %v1379
    %1611 = vmatprep.subr.bf16.mxu0 0
    %1612 = vmatpush1.bf16.msra.mxu0 %v1380
    %1613 = vmatprep.subr.bf16.mxu0 0
    %1614 = vmatpush1.bf16.msra.mxu0 %v1381
    %1615 = vmatprep.subr.bf16.mxu0 0
    %1616 = vmatpush1.bf16.msra.mxu0 %v1382
    %1617 = vmatprep.subr.bf16.mxu0 0
    %1618 = vmatpush1.bf16.msra.mxu0 %v1383
    %1619 = vmatprep.subr.bf16.mxu0 0
    %1620 = vmatpush1.bf16.msra.mxu0 %v1384
    %1621 = vmatprep.subr.bf16.mxu0 0
    %1622 = vmatpush1.bf16.msra.mxu0 %v1385
    %1623 = vmatprep.subr.bf16.mxu0 0
    %1624 = vmatpush1.bf16.msra.mxu0 %v1386
    %1625 = vmatprep.subr.bf16.mxu0 0
    %1626 = vmatpush1.bf16.msra.mxu0 %v1387
    %1627 = vmatprep.subr.bf16.mxu0 0
    %1628 = vmatpush1.bf16.msra.mxu0 %v1388
    %1629 = vmatprep.subr.bf16.mxu0 0
    %1630 = vmatpush1.bf16.msra.mxu0 %v1389
    %1631 = vmatprep.mubr.bf16.mxu0 %v929
    %1632 = vmatmul.mubr.bf16.gmra.mrb[0].mxu0 %v928
    %v1633 = vpop.f32.mrb[0].mxu0
    %v1634 = vadd.f32 %v1537, %v1633
    %v1635 = vpop.f32.mrb[0].mxu0
    %v1636 = vpop.f32.mrb[0].mxu0
    %v1637 = vadd.f32 %v1540, %v1636
    %v1638 = vpop.f32.mrb[0].mxu0
    %1639 = vmatprep.mubr.bf16.mxu0 %v938
    %1640 = vmatmul.mubr.bf16.gmra.mrb[0].mxu0 %v937
    %v1641 = vpop.f32.mrb[0].mxu0
    %v1642 = vadd.f32 %v1545, %v1641
    %v1643 = vpop.f32.mrb[0].mxu0
    %v1644 = vpop.f32.mrb[0].mxu0
    %v1645 = vadd.f32 %v1548, %v1644
    %v1646 = vpop.f32.mrb[0].mxu0
    %1647 = vmatprep.mubr.bf16.mxu0 %v947
    %1648 = vmatmul.mubr.bf16.gmra.mrb[0].mxu0 %v946
    %v1649 = vpop.f32.mrb[0].mxu0
    %v1650 = vadd.f32 %v1553, %v1649
    %v1651 = vpop.f32.mrb[0].mxu0
    %v1652 = vpop.f32.mrb[0].mxu0
    %v1653 = vadd.f32 %v1556, %v1652
    %v1654 = vpop.f32.mrb[0].mxu0
    %1655 = vmatprep.mubr.bf16.mxu0 %v956
    %1656 = vmatmul.mubr.bf16.gmra.mrb[0].mxu0 %v955
    %v1657 = vpop.f32.mrb[0].mxu0
    %v1658 = vadd.f32 %v1561, %v1657
    %v1659 = vpop.f32.mrb[0].mxu0
    %v1660 = vpop.f32.mrb[0].mxu0
    %v1661 = vadd.f32 %v1564, %v1660
    %v1662 = vpop.f32.mrb[0].mxu0
    %1663 = vmatprep.mubr.bf16.mxu0 %v965
    %1664 = vmatmul.mubr.bf16.gmra.mrb[0].mxu0 %v964
    %v1665 = vpop.f32.mrb[0].mxu0
    %v1666 = vadd.f32 %v1569, %v1665
    %v1667 = vpop.f32.mrb[0].mxu0
    %v1668 = vpop.f32.mrb[0].mxu0
    %v1669 = vadd.f32 %v1572, %v1668
    %v1670 = vpop.f32.mrb[0].mxu0
    %1671 = vmatprep.mubr.bf16.mxu0 %v974
    %1672 = vmatmul.mubr.bf16.gmra.mrb[0].mxu0 %v973
    %v1673 = vpop.f32.mrb[0].mxu0
    %v1674 = vadd.f32 %v1577, %v1673
    %v1675 = vpop.f32.mrb[0].mxu0
    %v1676 = vpop.f32.mrb[0].mxu0
    %v1677 = vadd.f32 %v1580, %v1676
    %v1678 = vpop.f32.mrb[0].mxu0
    %1679 = vmatprep.mubr.bf16.mxu0 %v983
    %1680 = vmatmul.mubr.bf16.gmra.mrb[0].mxu0 %v982
    %v1681 = vpop.f32.mrb[0].mxu0
    %v1682 = vadd.f32 %v1585, %v1681
    %v1683 = vpop.f32.mrb[0].mxu0
    %v1684 = vpop.f32.mrb[0].mxu0
    %v1685 = vadd.f32 %v1588, %v1684
    %v1686 = vpop.f32.mrb[0].mxu0
    %1687 = vmatprep.mubr.bf16.mxu0 %v992
    %1688 = vmatmul.mubr.bf16.gmra.mrb[0].mxu0 %v991
    %v1689 = vpop.f32.mrb[0].mxu0
    %v1690 = vadd.f32 %v1593, %v1689
    %v1691 = vpop.f32.mrb[0].mxu0
    %v1692 = vpop.f32.mrb[0].mxu0
    %v1693 = vadd.f32 %v1596, %v1692
    %v1694 = vpop.f32.mrb[0].mxu0
    %1695 = vdwg.mxu0
    %1696 = vmatprep.subr.bf16.mxu0 0
    %1697 = vmatpush1.bf16.msra.mxu0 %v1390
    %1698 = vmatprep.subr.bf16.mxu0 0
    %1699 = vmatpush1.bf16.msra.mxu0 %v1391
    %1700 = vmatprep.subr.bf16.mxu0 0
    %1701 = vmatpush1.bf16.msra.mxu0 %v1392
    %1702 = vmatprep.subr.bf16.mxu0 0
    %1703 = vmatpush1.bf16.msra.mxu0 %v1393
    %1704 = vmatprep.subr.bf16.mxu0 0
    %1705 = vmatpush1.bf16.msra.mxu0 %v1394
    %1706 = vmatprep.subr.bf16.mxu0 0
    %1707 = vmatpush1.bf16.msra.mxu0 %v1395
    %1708 = vmatprep.subr.bf16.mxu0 0
    %1709 = vmatpush1.bf16.msra.mxu0 %v1396
    %1710 = vmatprep.subr.bf16.mxu0 0
    %1711 = vmatpush1.bf16.msra.mxu0 %v1397
    %1712 = vmatprep.subr.bf16.mxu0 0
    %1713 = vmatpush1.bf16.msra.mxu0 %v1398
    %1714 = vmatprep.subr.bf16.mxu0 0
    %1715 = vmatpush1.bf16.msra.mxu0 %v1399
    %1716 = vmatprep.subr.bf16.mxu0 0
    %1717 = vmatpush1.bf16.msra.mxu0 %v1400
    %1718 = vmatprep.subr.bf16.mxu0 0
    %1719 = vmatpush1.bf16.msra.mxu0 %v1401
    %1720 = vmatprep.subr.bf16.mxu0 0
    %1721 = vmatpush1.bf16.msra.mxu0 %v1402
    %1722 = vmatprep.subr.bf16.mxu0 0
    %1723 = vmatpush1.bf16.msra.mxu0 %v1403
    %1724 = vmatprep.subr.bf16.mxu0 0
    %1725 = vmatpush1.bf16.msra.mxu0 %v1404
    %1726 = vmatprep.subr.bf16.mxu0 0
    %1727 = vmatpush1.bf16.msra.mxu0 %v1405
    %1728 = vmatprep.mubr.bf16.mxu0 %v931
    %1729 = vmatmul.mubr.bf16.gmra.mrb[0].mxu0 %v930
    %v1730 = vpop.f32.mrb[0].mxu0
    %v1731 = vadd.f32 %v1634, %v1730
    %v1732 = vpop.f32.mrb[0].mxu0
    %v1733 = vpop.f32.mrb[0].mxu0
    %v1734 = vadd.f32 %v1637, %v1733
    %v1735 = vpop.f32.mrb[0].mxu0
    %1736 = vmatprep.mubr.bf16.mxu0 %v940
    %1737 = vmatmul.mubr.bf16.gmra.mrb[0].mxu0 %v939
    %v1738 = vpop.f32.mrb[0].mxu0
    %v1739 = vadd.f32 %v1642, %v1738
    %v1740 = vpop.f32.mrb[0].mxu0
    %v1741 = vpop.f32.mrb[0].mxu0
    %v1742 = vadd.f32 %v1645, %v1741
    %v1743 = vpop.f32.mrb[0].mxu0
    %1744 = vmatprep.mubr.bf16.mxu0 %v949
    %1745 = vmatmul.mubr.bf16.gmra.mrb[0].mxu0 %v948
    %v1746 = vpop.f32.mrb[0].mxu0
    %v1747 = vadd.f32 %v1650, %v1746
    %v1748 = vpop.f32.mrb[0].mxu0
    %v1749 = vpop.f32.mrb[0].mxu0
    %v1750 = vadd.f32 %v1653, %v1749
    %v1751 = vpop.f32.mrb[0].mxu0
    %1752 = vmatprep.mubr.bf16.mxu0 %v958
    %1753 = vmatmul.mubr.bf16.gmra.mrb[0].mxu0 %v957
    %v1754 = vpop.f32.mrb[0].mxu0
    %v1755 = vadd.f32 %v1658, %v1754
    %v1756 = vpop.f32.mrb[0].mxu0
    %v1757 = vpop.f32.mrb[0].mxu0
    %v1758 = vadd.f32 %v1661, %v1757
    %v1759 = vpop.f32.mrb[0].mxu0
    %1760 = vmatprep.mubr.bf16.mxu0 %v967
    %1761 = vmatmul.mubr.bf16.gmra.mrb[0].mxu0 %v966
    %v1762 = vpop.f32.mrb[0].mxu0
    %v1763 = vadd.f32 %v1666, %v1762
    %v1764 = vpop.f32.mrb[0].mxu0
    %v1765 = vpop.f32.mrb[0].mxu0
    %v1766 = vadd.f32 %v1669, %v1765
    %v1767 = vpop.f32.mrb[0].mxu0
    %1768 = vmatprep.mubr.bf16.mxu0 %v976
    %1769 = vmatmul.mubr.bf16.gmra.mrb[0].mxu0 %v975
    %v1770 = vpop.f32.mrb[0].mxu0
    %v1771 = vadd.f32 %v1674, %v1770
    %v1772 = vpop.f32.mrb[0].mxu0
    %v1773 = vpop.f32.mrb[0].mxu0
    %v1774 = vadd.f32 %v1677, %v1773
    %v1775 = vpop.f32.mrb[0].mxu0
    %1776 = vmatprep.mubr.bf16.mxu0 %v985
    %1777 = vmatmul.mubr.bf16.gmra.mrb[0].mxu0 %v984
    %v1778 = vpop.f32.mrb[0].mxu0
    %v1779 = vadd.f32 %v1682, %v1778
    %v1780 = vpop.f32.mrb[0].mxu0
    %v1781 = vpop.f32.mrb[0].mxu0
    %v1782 = vadd.f32 %v1685, %v1781
    %v1783 = vpop.f32.mrb[0].mxu0
    %1784 = vmatprep.mubr.bf16.mxu0 %v994
    %1785 = vmatmul.mubr.bf16.gmra.mrb[0].mxu0 %v993
    %v1786 = vpop.f32.mrb[0].mxu0
    %v1787 = vadd.f32 %v1690, %v1786
    %v1788 = vpop.f32.mrb[0].mxu0
    %v1789 = vpop.f32.mrb[0].mxu0
    %v1790 = vadd.f32 %v1693, %v1789
    %v1791 = vpop.f32.mrb[0].mxu0
    %1792 = vdwg.mxu0
    %1793 = vmatprep.subr.bf16.mxu0 0
    %1794 = vmatpush1.bf16.msra.mxu0 %v1406
    %1795 = vmatprep.subr.bf16.mxu0 0
    %1796 = vmatpush1.bf16.msra.mxu0 %v1407
    %1797 = vmatprep.subr.bf16.mxu0 0
    %1798 = vmatpush1.bf16.msra.mxu0 %v1408
    %1799 = vmatprep.subr.bf16.mxu0 0
    %1800 = vmatpush1.bf16.msra.mxu0 %v1409
    %1801 = vmatprep.subr.bf16.mxu0 0
    %1802 = vmatpush1.bf16.msra.mxu0 %v1410
    %1803 = vmatprep.subr.bf16.mxu0 0
    %1804 = vmatpush1.bf16.msra.mxu0 %v1411
    %1805 = vmatprep.subr.bf16.mxu0 0
    %1806 = vmatpush1.bf16.msra.mxu0 %v1412
    %1807 = vmatprep.subr.bf16.mxu0 0
    %1808 = vmatpush1.bf16.msra.mxu0 %v1413
    %1809 = vmatprep.subr.bf16.mxu0 0
    %1810 = vmatpush1.bf16.msra.mxu0 %v1414
    %1811 = vmatprep.subr.bf16.mxu0 0
    %1812 = vmatpush1.bf16.msra.mxu0 %v1415
    %1813 = vmatprep.subr.bf16.mxu0 0
    %1814 = vmatpush1.bf16.msra.mxu0 %v1416
    %1815 = vmatprep.subr.bf16.mxu0 0
    %1816 = vmatpush1.bf16.msra.mxu0 %v1417
    %1817 = vmatprep.subr.bf16.mxu0 0
    %1818 = vmatpush1.bf16.msra.mxu0 %v1418
    %1819 = vmatprep.subr.bf16.mxu0 0
    %1820 = vmatpush1.bf16.msra.mxu0 %v1419
    %1821 = vmatprep.subr.bf16.mxu0 0
    %1822 = vmatpush1.bf16.msra.mxu0 %v1420
    %1823 = vmatprep.subr.bf16.mxu0 0
    %1824 = vmatpush1.bf16.msra.mxu0 %v1421
    %1825 = vmatprep.mubr.bf16.mxu0 %v933
    %1826 = vmatmul.mubr.bf16.gmra.mrb[0].mxu0 %v932
    %v1827 = vpop.f32.mrb[0].mxu0
    %v1828 = vadd.f32 %v1731, %v1827
    %v1829 = vpop.f32.mrb[0].mxu0
    %v1830 = vpop.f32.mrb[0].mxu0
    %v1831 = vadd.f32 %v1734, %v1830
    %v1832 = vpop.f32.mrb[0].mxu0
    %1833 = vmatprep.mubr.bf16.mxu0 %v942
    %1834 = vmatmul.mubr.bf16.gmra.mrb[0].mxu0 %v941
    %v1835 = vpop.f32.mrb[0].mxu0
    %v1836 = vadd.f32 %v1739, %v1835
    %v1837 = vpop.f32.mrb[0].mxu0
    %v1838 = vpop.f32.mrb[0].mxu0
    %v1839 = vadd.f32 %v1742, %v1838
    %v1840 = vpop.f32.mrb[0].mxu0
    %1841 = vmatprep.mubr.bf16.mxu0 %v951
    %1842 = vmatmul.mubr.bf16.gmra.mrb[0].mxu0 %v950
    %v1843 = vpop.f32.mrb[0].mxu0
    %v1844 = vadd.f32 %v1747, %v1843
    %v1845 = vpop.f32.mrb[0].mxu0
    %v1846 = vpop.f32.mrb[0].mxu0
    %v1847 = vadd.f32 %v1750, %v1846
    %v1848 = vpop.f32.mrb[0].mxu0
    %1849 = vmatprep.mubr.bf16.mxu0 %v960
    %1850 = vmatmul.mubr.bf16.gmra.mrb[0].mxu0 %v959
    %v1851 = vpop.f32.mrb[0].mxu0
    %v1852 = vadd.f32 %v1755, %v1851
    %v1853 = vpop.f32.mrb[0].mxu0
    %v1854 = vpop.f32.mrb[0].mxu0
    %v1855 = vadd.f32 %v1758, %v1854
    %v1856 = vpop.f32.mrb[0].mxu0
    %1857 = vmatprep.mubr.bf16.mxu0 %v969
    %1858 = vmatmul.mubr.bf16.gmra.mrb[0].mxu0 %v968
    %v1859 = vpop.f32.mrb[0].mxu0
    %v1860 = vadd.f32 %v1763, %v1859
    %v1861 = vpop.f32.mrb[0].mxu0
    %v1862 = vpop.f32.mrb[0].mxu0
    %v1863 = vadd.f32 %v1766, %v1862
    %v1864 = vpop.f32.mrb[0].mxu0
    %1865 = vmatprep.mubr.bf16.mxu0 %v978
    %1866 = vmatmul.mubr.bf16.gmra.mrb[0].mxu0 %v977
    %v1867 = vpop.f32.mrb[0].mxu0
    %v1868 = vadd.f32 %v1771, %v1867
    %v1869 = vpop.f32.mrb[0].mxu0
    %v1870 = vpop.f32.mrb[0].mxu0
    %v1871 = vadd.f32 %v1774, %v1870
    %v1872 = vpop.f32.mrb[0].mxu0
    %1873 = vmatprep.mubr.bf16.mxu0 %v987
    %1874 = vmatmul.mubr.bf16.gmra.mrb[0].mxu0 %v986
    %v1875 = vpop.f32.mrb[0].mxu0
    %v1876 = vadd.f32 %v1779, %v1875
    %v1877 = vpop.f32.mrb[0].mxu0
    %v1878 = vpop.f32.mrb[0].mxu0
    %v1879 = vadd.f32 %v1782, %v1878
    %v1880 = vpop.f32.mrb[0].mxu0
    %1881 = vmatprep.mubr.bf16.mxu0 %v996
    %1882 = vmatmul.mubr.bf16.gmra.mrb[0].mxu0 %v995
    %v1883 = vpop.f32.mrb[0].mxu0
    %v1884 = vadd.f32 %v1787, %v1883
    %v1885 = vpop.f32.mrb[0].mxu0
    %v1886 = vpop.f32.mrb[0].mxu0
    %v1887 = vadd.f32 %v1790, %v1886
    %v1888 = vpop.f32.mrb[0].mxu0
    %1889 = vdwg.mxu0
    %1890 = vmatprep.subr.bf16.mxu0 0
    %1891 = vmatpush1.bf16.msra.mxu0 %v1422
    %1892 = vmatprep.subr.bf16.mxu0 0
    %1893 = vmatpush1.bf16.msra.mxu0 %v1423
    %1894 = vmatprep.subr.bf16.mxu0 0
    %1895 = vmatpush1.bf16.msra.mxu0 %v1424
    %1896 = vmatprep.subr.bf16.mxu0 0
    %1897 = vmatpush1.bf16.msra.mxu0 %v1425
    %1898 = vmatprep.subr.bf16.mxu0 0
    %1899 = vmatpush1.bf16.msra.mxu0 %v1426
    %1900 = vmatprep.subr.bf16.mxu0 0
    %1901 = vmatpush1.bf16.msra.mxu0 %v1427
    %1902 = vmatprep.subr.bf16.mxu0 0
    %1903 = vmatpush1.bf16.msra.mxu0 %v1428
    %1904 = vmatprep.subr.bf16.mxu0 0
    %1905 = vmatpush1.bf16.msra.mxu0 %v1429
    %1906 = vmatprep.subr.bf16.mxu0 0
    %1907 = vmatpush1.bf16.msra.mxu0 0
    %1908 = vmatprep.subr.bf16.mxu0 0
    %1909 = vmatpush1.bf16.msra.mxu0 0
    %1910 = vmatprep.subr.bf16.mxu0 0
    %1911 = vmatpush1.bf16.msra.mxu0 0
    %1912 = vmatprep.subr.bf16.mxu0 0
    %1913 = vmatpush1.bf16.msra.mxu0 0
    %1914 = vmatprep.subr.bf16.mxu0 0
    %1915 = vmatpush1.bf16.msra.mxu0 0
    %1916 = vmatprep.subr.bf16.mxu0 0
    %1917 = vmatpush1.bf16.msra.mxu0 0
    %1918 = vmatprep.subr.bf16.mxu0 0
    %1919 = vmatpush1.bf16.msra.mxu0 0
    %1920 = vmatprep.subr.bf16.mxu0 0
    %1921 = vmatpush1.bf16.msra.mxu0 0
    %1922 = vmatprep.mubr.bf16.mxu0 0
    %1923 = vmatmul.mubr.bf16.gmra.mrb[0].mxu0 %v934
    %v1924 = vpop.f32.mrb[0].mxu0
    %v1925 = vadd.f32 %v1828, %v1924
    %v1926 = vpop.f32.mrb[0].mxu0
    %v1927 = vpop.f32.mrb[0].mxu0
    %v1928 = vadd.f32 %v1831, %v1927
    %v1929 = vpop.f32.mrb[0].mxu0
    %1930 = vmatprep.mubr.bf16.mxu0 0
    %1931 = vmatmul.mubr.bf16.gmra.mrb[0].mxu0 %v943
    %v1932 = vpop.f32.mrb[0].mxu0
    %v1933 = vadd.f32 %v1836, %v1932
    %v1934 = vpop.f32.mrb[0].mxu0
    %v1935 = vpop.f32.mrb[0].mxu0
    %v1936 = vadd.f32 %v1839, %v1935
    %v1937 = vpop.f32.mrb[0].mxu0
    %1938 = vmatprep.mubr.bf16.mxu0 0
    %1939 = vmatmul.mubr.bf16.gmra.mrb[0].mxu0 %v952
    %v1940 = vpop.f32.mrb[0].mxu0
    %v1941 = vadd.f32 %v1844, %v1940
    %v1942 = vpop.f32.mrb[0].mxu0
    %v1943 = vpop.f32.mrb[0].mxu0
    %v1944 = vadd.f32 %v1847, %v1943
    %v1945 = vpop.f32.mrb[0].mxu0
    %1946 = vmatprep.mubr.bf16.mxu0 0
    %1947 = vmatmul.mubr.bf16.gmra.mrb[0].mxu0 %v961
    %v1948 = vpop.f32.mrb[0].mxu0
    %v1949 = vadd.f32 %v1852, %v1948
    %v1950 = vpop.f32.mrb[0].mxu0
    %v1951 = vpop.f32.mrb[0].mxu0
    %v1952 = vadd.f32 %v1855, %v1951
    %v1953 = vpop.f32.mrb[0].mxu0
    %1954 = vmatprep.mubr.bf16.mxu0 0
    %1955 = vmatmul.mubr.bf16.gmra.mrb[0].mxu0 %v970
    %v1956 = vpop.f32.mrb[0].mxu0
    %v1957 = vadd.f32 %v1860, %v1956
    %v1958 = vpop.f32.mrb[0].mxu0
    %v1959 = vpop.f32.mrb[0].mxu0
    %v1960 = vadd.f32 %v1863, %v1959
    %v1961 = vpop.f32.mrb[0].mxu0
    %1962 = vmatprep.mubr.bf16.mxu0 0
    %1963 = vmatmul.mubr.bf16.gmra.mrb[0].mxu0 %v979
    %v1964 = vpop.f32.mrb[0].mxu0
    %v1965 = vadd.f32 %v1868, %v1964
    %v1966 = vpop.f32.mrb[0].mxu0
    %v1967 = vpop.f32.mrb[0].mxu0
    %v1968 = vadd.f32 %v1871, %v1967
    %v1969 = vpop.f32.mrb[0].mxu0
    %1970 = vmatprep.mubr.bf16.mxu0 0
    %1971 = vmatmul.mubr.bf16.gmra.mrb[0].mxu0 %v988
    %v1972 = vpop.f32.mrb[0].mxu0
    %v1973 = vadd.f32 %v1876, %v1972
    %v1974 = vpop.f32.mrb[0].mxu0
    %v1975 = vpop.f32.mrb[0].mxu0
    %v1976 = vadd.f32 %v1879, %v1975
    %v1977 = vpop.f32.mrb[0].mxu0
    %1978 = vmatprep.mubr.bf16.mxu0 0
    %1979 = vmatmul.mubr.bf16.gmra.mrb[0].mxu0 %v997
    %v1980 = vpop.f32.mrb[0].mxu0
    %v1981 = vadd.f32 %v1884, %v1980
    %v1982 = vpop.f32.mrb[0].mxu0
    %v1983 = vpop.f32.mrb[0].mxu0
    %v1984 = vadd.f32 %v1887, %v1983
    %v1985 = vpop.f32.mrb[0].mxu0
    %1986 = vdwg.mxu0
    %1987 = vst [vmem:[#allocation3] sm:$0xff] %v1925
    %1988 = vst [vmem:[#allocation3 + $0x8] sm:$0xff] %v1928
    %1989 = vst [vmem:[#allocation3 + $0x10] sm:$0xff] %v1933
    %1990 = vst [vmem:[#allocation3 + $0x18] sm:$0xff] %v1936
    %1991 = vst [vmem:[#allocation3 + $0x20] sm:$0xff] %v1941
    %1992 = vst [vmem:[#allocation3 + $0x28] sm:$0xff] %v1944
    %1993 = vst [vmem:[#allocation3 + $0x30] sm:$0xff] %v1949
    %1994 = vst [vmem:[#allocation3 + $0x38] sm:$0xff] %v1952
    %1995 = vst [vmem:[#allocation3 + $0x40] sm:$0xff] %v1957
    %1996 = vst [vmem:[#allocation3 + $0x48] sm:$0xff] %v1960
    %1997 = vst [vmem:[#allocation3 + $0x50] sm:$0xff] %v1965
    %1998 = vst [vmem:[#allocation3 + $0x58] sm:$0xff] %v1968
    %1999 = vst [vmem:[#allocation3 + $0x60] sm:$0xff] %v1973
    %2000 = vst [vmem:[#allocation3 + $0x68] sm:$0xff] %v1976
    %2001 = vst [vmem:[#allocation3 + $0x70] sm:$0xff] %v1981
    %2002 = vst [vmem:[#allocation3 + $0x78] sm:$0xff] %v1984
    // Predicated region
    $region14: #{downsample_forward.1} parent=1 // pred_check
      _
    $region15: #{downsample_forward.1} parent=1 // pred_check_branch
      %2004 = sbr.rel (0) target = $region17
    $region16: #{downsample_forward.1} parent=1 // pred_region
      %s2006 = ssub.s32 2048, 2048
      %2007 = vsyncadd [#allocation4], %s2006
      %s2008 = sshll.u32 [#allocation3], 4
      %s2009 = int_to_ptr.vmem [resolvable:$true] %s2008
      %2014 = dma.vmem_to_hbm [thread:$0]  %s2009, 2048, %s3, [#allocation4], 128, 128, 8
    $region17: #{downsample_forward.1} parent=1 // pred_fallthru
      _
    // Predicated region
    $region18: #{downsample_forward.1} parent=1 // pred_check
      _
    $region19: #{downsample_forward.1} parent=1 // pred_check_branch
      %2016 = sbr.rel (0) target = $region21
    $region20: #{downsample_forward.1} parent=1 // pred_region
      %2017 = dma.done [#allocation4], 2048
    $region21: #{downsample_forward.1} parent=1 // pred_fallthru
      _
    %2018 = vsyncpa [#allocation4], 1

</llo_original>
